<compile_context>
chip_gen: v6e
topology: v6e:2x2x1
jax: 0.10.0
libtpu: 0.0.40
codegen_flags: <defaults>
</compile_context>

<pallas_src>
import functools
import numpy as np
import jax
import jax.numpy as jnp
from jax.experimental import pallas as pl
from jax.experimental.pallas import tpu as pltpu


# ----------------------------------------------------------------------------
# Pallas kernel: one grid step = one batch tile (TB rows), all terms on 128 lanes
# ----------------------------------------------------------------------------
def vqe_energy_kernel(z_ref, theta_ref, selt_ref, a_ref, b_ref, out_ref, *, n_qubits):
    """Terms t (padded to 128 lanes):
         coeff[b, t] = (z_aug[b] @ A')[t] * (z_aug[b] @ B_aug)[t]
         expec[b, t] = prod_{k<n} ( selt[k,t]*c[b,k] + (1 - selt[k,t]) ),  c = cos(z*theta)
       Per-tile partial energy = sum over (batch rows, terms) of coeff*expec,
       written as a lane-dense (1, 1, 128) vector (lane 0 carries nothing special;
       padded lanes/rows contribute exactly 0 because A' is zero there)."""
    z = z_ref[...]                                # (TB, NP)
    theta = theta_ref[...]                        # (1,  NP)
    c = jnp.cos(z * theta)                        # (TB, NP)

    selt = selt_ref[...]                          # (NP, TP)

    # prodm[b, t] = prod_k ( 1 + selt[k,t] * (c[b,k] - 1) )
    #   selt row k broadcasts over sublanes, c column k broadcasts over lanes.
    prodm = 1.0 + selt[0:1, :] * (c[:, 0:1] - 1.0)               # (TB, TP)
    for k in range(1, n_qubits):                                  # static unroll, n=8
        prodm = prodm * (1.0 + selt[k:k + 1, :] * (c[:, k:k + 1] - 1.0))

    # Coefficients via two MXU matmuls on the augmented z (wv/ones already folded in).
    zi = jnp.dot(z, a_ref[...], preferred_element_type=jnp.float32)   # (TB, TP)
    zj = jnp.dot(z, b_ref[...], preferred_element_type=jnp.float32)   # (TB, TP)

    contrib = zi * zj * prodm                                          # (TB, TP)
    out_ref[...] = jnp.sum(contrib, axis=0, keepdims=True)[None]       # (1, 1, TP)


# ----------------------------------------------------------------------------
# Static operator tables (built once on host; wv and the "+1" are folded in)
# ----------------------------------------------------------------------------
def _build_static_tables(n, n_pad, t_pad, corr_matrix, high_corr_mask):
    selt = np.zeros((n_pad, t_pad), np.float32)    # selt[k,t]=1 if qubit k in term t's cos-range
    a_fold = np.zeros((n_pad, t_pad), np.float32)  # picks z_i, scaled by static weight
    b_aug = np.zeros((n_pad, t_pad), np.float32)   # picks z_j (pairs) or the constant-1 column
    one_col = n                                    # index of the constant-1 column in z_aug

    # single-Z terms: coeff z_i, operator Z_{n-1-i} -> prod_{k=0..n-1-i} c_k
    for i in range(n):
        t = i
        a_fold[i, t] = 1.0
        b_aug[one_col, t] = 1.0
        selt[0:n - i, t] = 1.0

    # ZZ terms (i<j, masked): coeff corr[i,j]*z_i*z_j -> prod_{k=n-j..n-1-i} c_k
    for i in range(n):
        for j in range(i + 1, n):
            if bool(high_corr_mask[i, j]):
                t = n + i * n + j
                a_fold[i, t] = float(corr_matrix[i, j])
                b_aug[j, t] = 1.0
                selt[n - j:n - i, t] = 1.0
    # padded term columns (t >= n + n*n) keep a_fold == 0 -> contribute exactly 0
    return selt, a_fold, b_aug


# ----------------------------------------------------------------------------
# Wrapper
# ----------------------------------------------------------------------------
def vqe_quantum_layer(batch_z, trainable_params, corr_matrix, high_corr_mask,
                      *, batch_tile=128):
    batch_z = jnp.asarray(batch_z, jnp.float32)
    B, N = batch_z.shape

    n_pad = ((N + 1 + 7) // 8) * 8                        # augmented + sublane-padded qubit dim
    t_pad = max(128, ((N + N * N + 127) // 128) * 128)    # term dim padded to 128 lanes

    selt, a_fold, b_aug = _build_static_tables(
        N, n_pad, t_pad, np.asarray(corr_matrix), np.asarray(high_corr_mask))

    num_tiles = -(-B // batch_tile)
    b_pad = num_tiles * batch_tile

    # z_aug = [z, 1, 0...]; padded batch rows are all-zero -> zero coefficients -> zero energy.
    z_aug = jnp.zeros((b_pad, n_pad), jnp.float32)
    z_aug = z_aug.at[:B, :N].set(batch_z)
    z_aug = z_aug.at[:B, N].set(1.0)

    theta = jnp.zeros((1, n_pad), jnp.float32)
    theta = theta.at[0, :N].set(jnp.asarray(trainable_params, jnp.float32))

    kernel = functools.partial(vqe_energy_kernel, n_qubits=N)
    partials = pl.pallas_call(
        kernel,
        out_shape=jax.ShapeDtypeStruct((num_tiles, 1, t_pad), jnp.float32),
        grid=(num_tiles,),
        in_specs=[
            pl.BlockSpec((batch_tile, n_pad), lambda i: (i, 0)),   # z_aug per batch tile
            pl.BlockSpec((1, n_pad), lambda i: (0, 0)),            # theta (grid-invariant)
            pl.BlockSpec((n_pad, t_pad), lambda i: (0, 0)),        # selt  (grid-invariant)
            pl.BlockSpec((n_pad, t_pad), lambda i: (0, 0)),        # A'    (grid-invariant)
            pl.BlockSpec((n_pad, t_pad), lambda i: (0, 0)),        # B_aug (grid-invariant)
        ],
        out_specs=pl.BlockSpec((1, 1, t_pad), lambda i: (i, 0, 0)),
        compiler_params=pltpu.CompilerParams(dimension_semantics=("parallel",)),
    )(z_aug, theta, jnp.asarray(selt), jnp.asarray(a_fold), jnp.asarray(b_aug))

    # Lane-dense partials reduced once in the wrapper; mean over the *real* batch size.
    return jnp.sum(partials) / B


# ----------------------------------------------------------------------------
# Independent numpy statevector reference (full 2^N simulation)
# ----------------------------------------------------------------------------
def _ref_energy_statevector(z, theta, corr, mask):
    n = z.shape[0]
    dim = 1 << n
    a = z.astype(np.float64) * theta.astype(np.float64)
    amp0 = np.cos(a / 2) * np.exp(-1j * a / 4)     # RY then RZ(a/2) on |0>
    amp1 = np.sin(a / 2) * np.exp(+1j * a / 4)
    idx = np.arange(dim)
    bits = (idx[:, None] >> np.arange(n)[None, :]) & 1        # bit k = qubit k
    state = np.prod(np.where(bits == 0, amp0[None, :], amp1[None, :]), axis=1)
    for k in range(n - 1):                                     # CX(k, k+1) chain
        ctrl = (idx >> k) & 1
        state = np.where(ctrl == 1, state[idx ^ (1 << (k + 1))], state)
    probs = np.abs(state) ** 2
    sgn = 1 - 2 * bits                                         # (dim, n)
    zexp = probs @ sgn                                         # <Z_q>
    e = 0.0
    for i in range(n):
        e += z[i] * zexp[n - 1 - i]
    for i in range(n):
        for j in range(i + 1, n):
            if mask[i, j]:
                zz = np.sum(probs * sgn[:, n - 1 - i] * sgn[:, n - 1 - j])
                e += corr[i, j] * z[i] * z[j] * zz
    return float(e)


# ----------------------------------------------------------------------------
if __name__ == "__main__":
    B, N = 4, 8  # batch of latent vectors, num_qubits = latent_dim = 8

    key = jax.random.PRNGKey(0)
    k1, k2, k3 = jax.random.split(key, 3)
    batch_z = jax.random.normal(k1, (B, N), jnp.float32)            # module input
    trainable_params = jax.random.uniform(k2, (N,), jnp.float32)    # torch.rand(num_qubits)

    raw = np.asarray(jax.random.normal(k3, (N, N), jnp.float32), np.float64)
    corr_matrix = (raw + raw.T) / 2.0
    np.fill_diagonal(corr_matrix, 1.0)
    high_corr_mask = (np.abs(corr_matrix) > 0.4) & ~np.eye(N, dtype=bool)

    out = vqe_quantum_layer(batch_z, trainable_params, corr_matrix, high_corr_mask)
    out = jax.block_until_ready(out)

    # correctness check against a full statevector simulation
    zs = np.asarray(batch_z, np.float64)
    th = np.asarray(trainable_params, np.float64)
    ref = np.mean([_ref_energy_statevector(zs[i], th, corr_matrix, high_corr_mask)
                   for i in range(B)])
    assert np.allclose(float(out), ref, rtol=1e-3, atol=1e-4), (float(out), ref)

    print("KERNEL_OK")
</pallas_src>

<mosaic_0001>
module attributes {stable_mosaic.version = 11 : i64} {
  func.func @vqe_energy_kernel(%arg0: i32, %arg1: memref<128x16xf32, #tpu.memory_space<vmem>>, %arg2: memref<1x16xf32, #tpu.memory_space<vmem>>, %arg3: memref<16x128xf32, #tpu.memory_space<vmem>>, %arg4: memref<16x128xf32, #tpu.memory_space<vmem>>, %arg5: memref<16x128xf32, #tpu.memory_space<vmem>>, %arg6: memref<1x1x128xf32, #tpu.memory_space<vmem>>) attributes {dimension_semantics = [#tpu.dimension_semantics<parallel>], iteration_bounds = array<i64: 1>, scalar_prefetch = 0 : i64, scratch_operands = 0 : i64, tpu.core_type = #tpu.core_type<tc>, window_params = [{transform_indices = @transform_0, window_bounds = array<i64: 128, 16>}, {pipeline_mode = #tpu.pipeline_mode<synchronous>, transform_indices = @transform_1, window_bounds = array<i64: 1, 16>}, {pipeline_mode = #tpu.pipeline_mode<synchronous>, transform_indices = @transform_2, window_bounds = array<i64: 16, 128>}, {pipeline_mode = #tpu.pipeline_mode<synchronous>, transform_indices = @transform_3, window_bounds = array<i64: 16, 128>}, {pipeline_mode = #tpu.pipeline_mode<synchronous>, transform_indices = @transform_4, window_bounds = array<i64: 16, 128>}, {transform_indices = @transform_5, window_bounds = array<i64: 1, 1, 128>}]} {
    %c0 = arith.constant 0 : index
    %c0_0 = arith.constant 0 : index
    %0 = vector.load %arg1[%c0, %c0_0] : memref<128x16xf32, #tpu.memory_space<vmem>>, vector<128x16xf32>
    %c0_1 = arith.constant 0 : index
    %c0_2 = arith.constant 0 : index
    %1 = vector.load %arg2[%c0_1, %c0_2] : memref<1x16xf32, #tpu.memory_space<vmem>>, vector<1x16xf32>
    %2 = vector.broadcast %1 : vector<1x16xf32> to vector<128x16xf32>
    %3 = arith.mulf %0, %2 : vector<128x16xf32>
    %4 = math.cos %3 : vector<128x16xf32>
    %c0_3 = arith.constant 0 : index
    %c0_4 = arith.constant 0 : index
    %5 = vector.load %arg3[%c0_3, %c0_4] : memref<16x128xf32, #tpu.memory_space<vmem>>, vector<16x128xf32>
    %6 = vector.extract_strided_slice %5 {offsets = [0, 0], sizes = [1, 128], strides = [1, 1]} : vector<16x128xf32> to vector<1x128xf32>
    %7 = vector.extract_strided_slice %4 {offsets = [0, 0], sizes = [128, 1], strides = [1, 1]} : vector<128x16xf32> to vector<128x1xf32>
    %cst = arith.constant 1.000000e+00 : f32
    %8 = vector.broadcast %cst : f32 to vector<128x1xf32>
    %9 = arith.subf %7, %8 : vector<128x1xf32>
    %10 = vector.broadcast %6 : vector<1x128xf32> to vector<128x128xf32>
    %11 = vector.broadcast %9 : vector<128x1xf32> to vector<128x128xf32>
    %12 = arith.mulf %10, %11 : vector<128x128xf32>
    %cst_5 = arith.constant 1.000000e+00 : f32
    %13 = vector.broadcast %cst_5 : f32 to vector<128x128xf32>
    %14 = arith.addf %13, %12 : vector<128x128xf32>
    %15 = vector.extract_strided_slice %5 {offsets = [1, 0], sizes = [1, 128], strides = [1, 1]} : vector<16x128xf32> to vector<1x128xf32>
    %16 = vector.extract_strided_slice %4 {offsets = [0, 1], sizes = [128, 1], strides = [1, 1]} : vector<128x16xf32> to vector<128x1xf32>
    %cst_6 = arith.constant 1.000000e+00 : f32
    %17 = vector.broadcast %cst_6 : f32 to vector<128x1xf32>
    %18 = arith.subf %16, %17 : vector<128x1xf32>
    %19 = vector.broadcast %15 : vector<1x128xf32> to vector<128x128xf32>
    %20 = vector.broadcast %18 : vector<128x1xf32> to vector<128x128xf32>
    %21 = arith.mulf %19, %20 : vector<128x128xf32>
    %cst_7 = arith.constant 1.000000e+00 : f32
    %22 = vector.broadcast %cst_7 : f32 to vector<128x128xf32>
    %23 = arith.addf %22, %21 : vector<128x128xf32>
    %24 = arith.mulf %14, %23 : vector<128x128xf32>
    %25 = vector.extract_strided_slice %5 {offsets = [2, 0], sizes = [1, 128], strides = [1, 1]} : vector<16x128xf32> to vector<1x128xf32>
    %26 = vector.extract_strided_slice %4 {offsets = [0, 2], sizes = [128, 1], strides = [1, 1]} : vector<128x16xf32> to vector<128x1xf32>
    %cst_8 = arith.constant 1.000000e+00 : f32
    %27 = vector.broadcast %cst_8 : f32 to vector<128x1xf32>
    %28 = arith.subf %26, %27 : vector<128x1xf32>
    %29 = vector.broadcast %25 : vector<1x128xf32> to vector<128x128xf32>
    %30 = vector.broadcast %28 : vector<128x1xf32> to vector<128x128xf32>
    %31 = arith.mulf %29, %30 : vector<128x128xf32>
    %cst_9 = arith.constant 1.000000e+00 : f32
    %32 = vector.broadcast %cst_9 : f32 to vector<128x128xf32>
    %33 = arith.addf %32, %31 : vector<128x128xf32>
    %34 = arith.mulf %24, %33 : vector<128x128xf32>
    %35 = vector.extract_strided_slice %5 {offsets = [3, 0], sizes = [1, 128], strides = [1, 1]} : vector<16x128xf32> to vector<1x128xf32>
    %36 = vector.extract_strided_slice %4 {offsets = [0, 3], sizes = [128, 1], strides = [1, 1]} : vector<128x16xf32> to vector<128x1xf32>
    %cst_10 = arith.constant 1.000000e+00 : f32
    %37 = vector.broadcast %cst_10 : f32 to vector<128x1xf32>
    %38 = arith.subf %36, %37 : vector<128x1xf32>
    %39 = vector.broadcast %35 : vector<1x128xf32> to vector<128x128xf32>
    %40 = vector.broadcast %38 : vector<128x1xf32> to vector<128x128xf32>
    %41 = arith.mulf %39, %40 : vector<128x128xf32>
    %cst_11 = arith.constant 1.000000e+00 : f32
    %42 = vector.broadcast %cst_11 : f32 to vector<128x128xf32>
    %43 = arith.addf %42, %41 : vector<128x128xf32>
    %44 = arith.mulf %34, %43 : vector<128x128xf32>
    %45 = vector.extract_strided_slice %5 {offsets = [4, 0], sizes = [1, 128], strides = [1, 1]} : vector<16x128xf32> to vector<1x128xf32>
    %46 = vector.extract_strided_slice %4 {offsets = [0, 4], sizes = [128, 1], strides = [1, 1]} : vector<128x16xf32> to vector<128x1xf32>
    %cst_12 = arith.constant 1.000000e+00 : f32
    %47 = vector.broadcast %cst_12 : f32 to vector<128x1xf32>
    %48 = arith.subf %46, %47 : vector<128x1xf32>
    %49 = vector.broadcast %45 : vector<1x128xf32> to vector<128x128xf32>
    %50 = vector.broadcast %48 : vector<128x1xf32> to vector<128x128xf32>
    %51 = arith.mulf %49, %50 : vector<128x128xf32>
    %cst_13 = arith.constant 1.000000e+00 : f32
    %52 = vector.broadcast %cst_13 : f32 to vector<128x128xf32>
    %53 = arith.addf %52, %51 : vector<128x128xf32>
    %54 = arith.mulf %44, %53 : vector<128x128xf32>
    %55 = vector.extract_strided_slice %5 {offsets = [5, 0], sizes = [1, 128], strides = [1, 1]} : vector<16x128xf32> to vector<1x128xf32>
    %56 = vector.extract_strided_slice %4 {offsets = [0, 5], sizes = [128, 1], strides = [1, 1]} : vector<128x16xf32> to vector<128x1xf32>
    %cst_14 = arith.constant 1.000000e+00 : f32
    %57 = vector.broadcast %cst_14 : f32 to vector<128x1xf32>
    %58 = arith.subf %56, %57 : vector<128x1xf32>
    %59 = vector.broadcast %55 : vector<1x128xf32> to vector<128x128xf32>
    %60 = vector.broadcast %58 : vector<128x1xf32> to vector<128x128xf32>
    %61 = arith.mulf %59, %60 : vector<128x128xf32>
    %cst_15 = arith.constant 1.000000e+00 : f32
    %62 = vector.broadcast %cst_15 : f32 to vector<128x128xf32>
    %63 = arith.addf %62, %61 : vector<128x128xf32>
    %64 = arith.mulf %54, %63 : vector<128x128xf32>
    %65 = vector.extract_strided_slice %5 {offsets = [6, 0], sizes = [1, 128], strides = [1, 1]} : vector<16x128xf32> to vector<1x128xf32>
    %66 = vector.extract_strided_slice %4 {offsets = [0, 6], sizes = [128, 1], strides = [1, 1]} : vector<128x16xf32> to vector<128x1xf32>
    %cst_16 = arith.constant 1.000000e+00 : f32
    %67 = vector.broadcast %cst_16 : f32 to vector<128x1xf32>
    %68 = arith.subf %66, %67 : vector<128x1xf32>
    %69 = vector.broadcast %65 : vector<1x128xf32> to vector<128x128xf32>
    %70 = vector.broadcast %68 : vector<128x1xf32> to vector<128x128xf32>
    %71 = arith.mulf %69, %70 : vector<128x128xf32>
    %cst_17 = arith.constant 1.000000e+00 : f32
    %72 = vector.broadcast %cst_17 : f32 to vector<128x128xf32>
    %73 = arith.addf %72, %71 : vector<128x128xf32>
    %74 = arith.mulf %64, %73 : vector<128x128xf32>
    %75 = vector.extract_strided_slice %5 {offsets = [7, 0], sizes = [1, 128], strides = [1, 1]} : vector<16x128xf32> to vector<1x128xf32>
    %76 = vector.extract_strided_slice %4 {offsets = [0, 7], sizes = [128, 1], strides = [1, 1]} : vector<128x16xf32> to vector<128x1xf32>
    %cst_18 = arith.constant 1.000000e+00 : f32
    %77 = vector.broadcast %cst_18 : f32 to vector<128x1xf32>
    %78 = arith.subf %76, %77 : vector<128x1xf32>
    %79 = vector.broadcast %75 : vector<1x128xf32> to vector<128x128xf32>
    %80 = vector.broadcast %78 : vector<128x1xf32> to vector<128x128xf32>
    %81 = arith.mulf %79, %80 : vector<128x128xf32>
    %cst_19 = arith.constant 1.000000e+00 : f32
    %82 = vector.broadcast %cst_19 : f32 to vector<128x128xf32>
    %83 = arith.addf %82, %81 : vector<128x128xf32>
    %84 = arith.mulf %74, %83 : vector<128x128xf32>
    %c0_20 = arith.constant 0 : index
    %c0_21 = arith.constant 0 : index
    %85 = vector.load %arg4[%c0_20, %c0_21] : memref<16x128xf32, #tpu.memory_space<vmem>>, vector<16x128xf32>
    %cst_22 = arith.constant dense<0.000000e+00> : vector<128x128xf32>
    %86 = tpu.matmul %0, %85, %cst_22 {dimension_numbers = #tpu.dot_dimension_numbers<[1], [0], [0], [1], [0, 0, 1, 1], [], []>} : vector<128x16xf32>, vector<16x128xf32>, vector<128x128xf32> -> vector<128x128xf32>
    %c0_23 = arith.constant 0 : index
    %c0_24 = arith.constant 0 : index
    %87 = vector.load %arg5[%c0_23, %c0_24] : memref<16x128xf32, #tpu.memory_space<vmem>>, vector<16x128xf32>
    %cst_25 = arith.constant dense<0.000000e+00> : vector<128x128xf32>
    %88 = tpu.matmul %0, %87, %cst_25 {dimension_numbers = #tpu.dot_dimension_numbers<[1], [0], [0], [1], [0, 0, 1, 1], [], []>} : vector<128x16xf32>, vector<16x128xf32>, vector<128x128xf32> -> vector<128x128xf32>
    %89 = arith.mulf %86, %88 : vector<128x128xf32>
    %90 = arith.mulf %89, %84 : vector<128x128xf32>
    %cst_26 = arith.constant dense<0.000000e+00> : vector<128xf32>
    %91 = vector.multi_reduction <add>, %90, %cst_26 [0] : vector<128x128xf32> to vector<128xf32>
    %92 = vector.shape_cast %91 : vector<128xf32> to vector<1x128xf32>
    %93 = vector.shape_cast %92 : vector<1x128xf32> to vector<1x1x128xf32>
    %c0_27 = arith.constant 0 : index
    %c0_28 = arith.constant 0 : index
    %c0_29 = arith.constant 0 : index
    %94 = vector.load %arg6[%c0_27, %c0_28, %c0_29] : memref<1x1x128xf32, #tpu.memory_space<vmem>>, vector<1x1x128xf32>
    tpu.vector_store %arg6[%c0_27, %c0_28, %c0_29], %93 {strides = array<i32>} : memref<1x1x128xf32, #tpu.memory_space<vmem>>, vector<1x1x128xf32>,
    return
  }
  func.func @transform_0(%arg0: i32) -> (i32, i32) {
    %c0_i32 = arith.constant 0 : i32
    %c0_i32_0 = arith.constant 0 : i32
    return %arg0, %c0_i32 : i32, i32
  }
  func.func @transform_1(%arg0: i32) -> (i32, i32) {
    %c0_i32 = arith.constant 0 : i32
    %c0_i32_0 = arith.constant 0 : i32
    %c0_i32_1 = arith.constant 0 : i32
    return %c0_i32, %c0_i32_0 : i32, i32
  }
  func.func @transform_2(%arg0: i32) -> (i32, i32) {
    %c0_i32 = arith.constant 0 : i32
    %c0_i32_0 = arith.constant 0 : i32
    %c0_i32_1 = arith.constant 0 : i32
    return %c0_i32, %c0_i32_0 : i32, i32
  }
  func.func @transform_3(%arg0: i32) -> (i32, i32) {
    %c0_i32 = arith.constant 0 : i32
    %c0_i32_0 = arith.constant 0 : i32
    %c0_i32_1 = arith.constant 0 : i32
    return %c0_i32, %c0_i32_0 : i32, i32
  }
  func.func @transform_4(%arg0: i32) -> (i32, i32) {
    %c0_i32 = arith.constant 0 : i32
    %c0_i32_0 = arith.constant 0 : i32
    %c0_i32_1 = arith.constant 0 : i32
    return %c0_i32, %c0_i32_0 : i32, i32
  }
  func.func @transform_5(%arg0: i32) -> (i32, i32, i32) {
    %c0_i32 = arith.constant 0 : i32
    %c0_i32_0 = arith.constant 0 : i32
    %c0_i32_1 = arith.constant 0 : i32
    return %arg0, %c0_i32, %c0_i32_0 : i32, i32, i32
  }
}

</mosaic_0001>

<llo_original>
// kernel: tpu_custom_call.1
$region0: #{tpu_custom_call.1}
  #allocation0 [shape = 'u32[]', space=smem, size = 0x4, offset = 0x4, fixed_abs, tag = 'smem constant byte address 0x4 - core index']
  #allocation1 [shape = 'u32[144,128]{1,0:T(1,128)}', space=vmem, size = 0x12000, scoped, tag = 'internal scratch']
  %s0 = inlined_call_operand.vmem [shape: f32[128,16], index: 0, kind: input, shape index: {}]
  %s1 = inlined_call_operand.vmem [shape: f32[1,16], index: 1, kind: input, shape index: {}]
  %s2 = inlined_call_operand.vmem [shape: f32[16,128], index: 2, kind: input, shape index: {}]
  %s3 = inlined_call_operand.vmem [shape: f32[16,128], index: 3, kind: input, shape index: {}]
  %s4 = inlined_call_operand.vmem [shape: f32[16,128], index: 4, kind: input, shape index: {}]
  %s5 = inlined_call_operand.hbm [shape: f32[1,1,128], index: 5, kind: output, shape index: {}]
  %s6 = sld [smem:[#allocation0]]
  $region30: #{tpu_custom_call.1} parent=0
    _
  %s8 = ssub.s32 1, %s6
  %s9 = scalar_select 0, %s8, %s6
  $region1: #{tpu_custom_call.1} parent=0
    #allocation2 [shape = 'u8[512]{0}', space=vmem, size = 0x400, scoped, tag = 'output window, operand 0, single buffered']
    #allocation3 [shape = 's32[1]{0}', space=sflag, size = 0x4, scoped, tag = 'scoped memory for tpu_custom_call.1']
    %10 = vsyncpa [#allocation3], 0
    // Predicated region
    $region2: #{tpu_custom_call.1} parent=1 // pred_check
      _
    $region3: #{tpu_custom_call.1} parent=1 // pred_check_branch
      %12 = sbr.rel (0) target = $region5
    $region4: #{tpu_custom_call.1} parent=1 // pred_region
      _
    $region5: #{tpu_custom_call.1} parent=1 // pred_fallthru
      _
    // Predicated region
    $region6: #{tpu_custom_call.1} parent=1 // pred_check
      _
    $region7: #{tpu_custom_call.1} parent=1 // pred_check_branch
      %14 = sbr.rel (0) target = $region9
    $region8: #{tpu_custom_call.1} parent=1 // pred_region
      _
    $region9: #{tpu_custom_call.1} parent=1 // pred_fallthru
      _
    // Predicated region
    $region10: #{tpu_custom_call.1} parent=1 // pred_check
      _
    $region11: #{tpu_custom_call.1} parent=1 // pred_check_branch
      %16 = sbr.rel (0) target = $region13
    $region12: #{tpu_custom_call.1} parent=1 // pred_region
      _
    $region13: #{tpu_custom_call.1} parent=1 // pred_fallthru
      _
    // Predicated region
    $region14: #{tpu_custom_call.1} parent=1 // pred_check
      _
    $region15: #{tpu_custom_call.1} parent=1 // pred_check_branch
      %18 = sbr.rel (0) target = $region17
    $region16: #{tpu_custom_call.1} parent=1 // pred_region
      _
    $region17: #{tpu_custom_call.1} parent=1 // pred_fallthru
      _
    // Predicated region
    $region18: #{tpu_custom_call.1} parent=1 // pred_check
      _
    $region19: #{tpu_custom_call.1} parent=1 // pred_check_branch
      %20 = sbr.rel (0) target = $region21
    $region20: #{tpu_custom_call.1} parent=1 // pred_region
      _
    $region21: #{tpu_custom_call.1} parent=1 // pred_fallthru
      _
    %v21 = vld [vmem:[%s0] sm:$0xff]
    %v22 = vld [vmem:[%s0 + $0x8] sm:$0xff]
    %v23 = vld [vmem:[%s0 + $0x10] sm:$0xff]
    %v24 = vld [vmem:[%s0 + $0x18] sm:$0xff]
    %v25 = vld [vmem:[%s0 + $0x20] sm:$0xff]
    %v26 = vld [vmem:[%s0 + $0x28] sm:$0xff]
    %v27 = vld [vmem:[%s0 + $0x30] sm:$0xff]
    %v28 = vld [vmem:[%s0 + $0x38] sm:$0xff]
    %v29 = vld [vmem:[%s0 + $0x40] sm:$0xff]
    %v30 = vld [vmem:[%s0 + $0x48] sm:$0xff]
    %v31 = vld [vmem:[%s0 + $0x50] sm:$0xff]
    %v32 = vld [vmem:[%s0 + $0x58] sm:$0xff]
    %v33 = vld [vmem:[%s0 + $0x60] sm:$0xff]
    %v34 = vld [vmem:[%s0 + $0x68] sm:$0xff]
    %v35 = vld [vmem:[%s0 + $0x70] sm:$0xff]
    %v36 = vld [vmem:[%s0 + $0x78] sm:$0xff]
    %v37 = vld [vmem:[%s1] sm:$0x1]
    %v39 = vlaneseq
    %v40 = vshrl.u32 %v39, 7
    %v41 = vsub.s32 0, %v40
    %v42 = vrot.slane %v37, %v41
    %v44 = vmul.f32 %v21, %v42
    %v45 = vmul.f32 %v22, %v42
    %v46 = vmul.f32 %v23, %v42
    %v47 = vmul.f32 %v24, %v42
    %v48 = vmul.f32 %v25, %v42
    %v49 = vmul.f32 %v26, %v42
    %v50 = vmul.f32 %v27, %v42
    %v51 = vmul.f32 %v28, %v42
    %v52 = vmul.f32 %v29, %v42
    %v53 = vmul.f32 %v30, %v42
    %v54 = vmul.f32 %v31, %v42
    %v55 = vmul.f32 %v32, %v42
    %v56 = vmul.f32 %v33, %v42
    %v57 = vmul.f32 %v34, %v42
    %v58 = vmul.f32 %v35, %v42
    %v59 = vmul.f32 %v36, %v42
    %v60 = vand.u32 2147483647, %v44
    %vm61 = vcmp.le.f32.partialorder %v60, 0.7853982
    %vm62 = vcmp.lt.s32.totalorder %v44, 0
    %v63 = vand.u32 %v44, 2139095040
    %v64 = vshrl.u32 %v63, 23
    %v65 = vsub.s32 %v64, 127
    %v66 = vand.u32 2147483647, %v44
    %v67 = vand.u32 %v66, 8388607
    %v68 = vor.u32 %v67, 8388608
    %v69 = vsub.s32 0, %v68
    %v70 = vadd.s32 %v65, 1
    %vm71 = vcmp.gt.s32.totalorder %v70, 0
    %v72 = vsel %vm71, %v70, 0
    %v73 = vshrl.u32 %v72, 5
    %v74 = vand.u32 %v72, 31
    %v75 = vsub.s32 32, %v74
    %v76 = vshrl.u32 683565275, %v75
    %v77 = vshll.u32 683565275, %v74
    %v78 = vshrl.u32 2475754826, %v75
    %v79 = vor.u32 %v77, %v78
    %v80 = vshll.u32 2475754826, %v74
    %v81 = vshrl.u32 2131351028, %v75
    %v82 = vor.u32 %v80, %v81
    %v83 = vshll.u32 2131351028, %v74
    %v84 = vshrl.u32 2102212464, %v75
    %v85 = vor.u32 %v83, %v84
    %v86 = vshll.u32 2102212464, %v74
    %v87 = vshrl.u32 920167782, %v75
    %v88 = vor.u32 %v86, %v87
    %v89 = vshll.u32 920167782, %v74
    %v90 = vshrl.u32 1326507024, %v75
    %v91 = vor.u32 %v89, %v90
    %vm92 = vcmp.lt.s32.totalorder %v73, 1
    %vm93 = vcmp.lt.s32.totalorder %v73, 2
    %vm94 = vcmp.lt.s32.totalorder %v73, 3
    %vm95 = vcmp.lt.s32.totalorder %v73, 4
    %v96 = vsel %vm92, %v76, %v79
    %v97 = vsel %vm95, %v85, 2102212464
    %v98 = vsel %vm94, %v82, %v97
    %v99 = vsel %vm93, %v96, %v98
    %v100 = vsel %vm92, %v79, %v82
    %v101 = vsel %vm95, %v88, 920167782
    %v102 = vsel %vm94, %v85, %v101
    %v103 = vsel %vm93, %v100, %v102
    %v104 = vsel %vm92, %v82, %v85
    %v105 = vsel %vm95, %v91, 1326507024
    %v106 = vsel %vm94, %v88, %v105
    %v107 = vsel %vm93, %v104, %v106
    %v108 = vshll.u32 %v68, 8
    %v109 = vmul.u32.u64.compose %v108, %v107
    %v110 = vextract.low.u32 %v109
    %v111 = vextract.high.u32 %v109
    %v112 = vmul.u32.u64.compose %v108, %v103
    %v113 = vextract.low.u32 %v112
    %v114 = vextract.high.u32 %v112
    %v115 = vmul.u32 %v108, %v99
    %v116 = vadd.s32 %v111, %v113
    %vm117 = vc.u32 %v111, %v113
    %v118 = vadd.s32 %v114, 1
    %v119 = vsel %vm117, %v118, %v114
    %v120 = vadd.s32 %v115, %v119
    %v121 = vadd.s32 %v120, 536870912
    %v122 = vshrl.u32 %v121, 30
    %v123 = vshll.u32 %v122, 30
    %v124 = vsub.s32 %v120, %v123
    %vm125 = vcmp.lt.s32.totalorder %v124, 0
    %v126 = vsub.s32 0, %v124
    %v127 = vsel %vm125, %v126, %v124
    %v128 = vclz %v127
    %v129 = vsub.s32 %v128, 2
    %vm130 = vcmp.gt.s32.totalorder 0, %v129
    %v131 = vsel %vm130, 0, %v129
    %v132 = vsub.s32 32, %v131
    %v133 = vshll.u32 %v124, %v131
    %v134 = vshrl.u32 %v116, %v132
    %v135 = vor.u32 %v133, %v134
    %v136 = vsub.s32 4294967266, %v131
    %v137 = vadd.s32 %v136, 127
    %v138 = vshll.u32 %v137, 23
    %v139 = vor.u32 4788187, %v138
    %v140 = vand.u32 2147483647, %v139
    %v142 = vcvt.s32.f32 %v135
    %v143 = vmul.f32 %v142, %v140
    %v144 = vxor.u32 %v143, 2147483648
    %v145 = vsel %vm62, %v144, %v143
    %v146 = vsub.s32 4, %v122
    %v147 = vsel %vm62, %v146, %v122
    %v148 = vsel %vm61, %v44, %v145
    %v149 = vsel %vm61, 0, %v147
    %v150 = vcosq.f32.pop %v148
    %v151 = vsinq.f32.pop %v148
    %vm152 = vweird.f32 %v44
    %v153 = vand.u32 %v149, 3
    %vm154 = vcmp.lt.s32.totalorder %v153, 2
    %vm155 = vcmp.eq.s32.totalorder %v153, 0
    %v156 = vxor.u32 %v151, 2147483648
    %v157 = vsel %vm155, %v150, %v156
    %vm158 = vcmp.eq.s32.totalorder %v153, 2
    %v159 = vxor.u32 %v150, 2147483648
    %v160 = vsel %vm158, %v159, %v151
    %v161 = vsel %vm154, %v157, %v160
    %v162 = vsel %vm152, nan, %v161
    %v163 = vand.u32 2147483647, %v45
    %vm164 = vcmp.le.f32.partialorder %v163, 0.7853982
    %vm165 = vcmp.lt.s32.totalorder %v45, 0
    %v166 = vand.u32 %v45, 2139095040
    %v167 = vshrl.u32 %v166, 23
    %v168 = vsub.s32 %v167, 127
    %v169 = vand.u32 2147483647, %v45
    %v170 = vand.u32 %v169, 8388607
    %v171 = vor.u32 %v170, 8388608
    %v172 = vsub.s32 0, %v171
    %v173 = vadd.s32 %v168, 1
    %vm174 = vcmp.gt.s32.totalorder %v173, 0
    %v175 = vsel %vm174, %v173, 0
    %v176 = vshrl.u32 %v175, 5
    %v177 = vand.u32 %v175, 31
    %v178 = vsub.s32 32, %v177
    %v179 = vshrl.u32 683565275, %v178
    %v180 = vshll.u32 683565275, %v177
    %v181 = vshrl.u32 2475754826, %v178
    %v182 = vor.u32 %v180, %v181
    %v183 = vshll.u32 2475754826, %v177
    %v184 = vshrl.u32 2131351028, %v178
    %v185 = vor.u32 %v183, %v184
    %v186 = vshll.u32 2131351028, %v177
    %v187 = vshrl.u32 2102212464, %v178
    %v188 = vor.u32 %v186, %v187
    %v189 = vshll.u32 2102212464, %v177
    %v190 = vshrl.u32 920167782, %v178
    %v191 = vor.u32 %v189, %v190
    %v192 = vshll.u32 920167782, %v177
    %v193 = vshrl.u32 1326507024, %v178
    %v194 = vor.u32 %v192, %v193
    %vm195 = vcmp.lt.s32.totalorder %v176, 1
    %vm196 = vcmp.lt.s32.totalorder %v176, 2
    %vm197 = vcmp.lt.s32.totalorder %v176, 3
    %vm198 = vcmp.lt.s32.totalorder %v176, 4
    %v199 = vsel %vm195, %v179, %v182
    %v200 = vsel %vm198, %v188, 2102212464
    %v201 = vsel %vm197, %v185, %v200
    %v202 = vsel %vm196, %v199, %v201
    %v203 = vsel %vm195, %v182, %v185
    %v204 = vsel %vm198, %v191, 920167782
    %v205 = vsel %vm197, %v188, %v204
    %v206 = vsel %vm196, %v203, %v205
    %v207 = vsel %vm195, %v185, %v188
    %v208 = vsel %vm198, %v194, 1326507024
    %v209 = vsel %vm197, %v191, %v208
    %v210 = vsel %vm196, %v207, %v209
    %v211 = vshll.u32 %v171, 8
    %v212 = vmul.u32.u64.compose %v211, %v210
    %v213 = vextract.low.u32 %v212
    %v214 = vextract.high.u32 %v212
    %v215 = vmul.u32.u64.compose %v211, %v206
    %v216 = vextract.low.u32 %v215
    %v217 = vextract.high.u32 %v215
    %v218 = vmul.u32 %v211, %v202
    %v219 = vadd.s32 %v214, %v216
    %vm220 = vc.u32 %v214, %v216
    %v221 = vadd.s32 %v217, 1
    %v222 = vsel %vm220, %v221, %v217
    %v223 = vadd.s32 %v218, %v222
    %v224 = vadd.s32 %v223, 536870912
    %v225 = vshrl.u32 %v224, 30
    %v226 = vshll.u32 %v225, 30
    %v227 = vsub.s32 %v223, %v226
    %vm228 = vcmp.lt.s32.totalorder %v227, 0
    %v229 = vsub.s32 0, %v227
    %v230 = vsel %vm228, %v229, %v227
    %v231 = vclz %v230
    %v232 = vsub.s32 %v231, 2
    %vm233 = vcmp.gt.s32.totalorder 0, %v232
    %v234 = vsel %vm233, 0, %v232
    %v235 = vsub.s32 32, %v234
    %v236 = vshll.u32 %v227, %v234
    %v237 = vshrl.u32 %v219, %v235
    %v238 = vor.u32 %v236, %v237
    %v239 = vsub.s32 4294967266, %v234
    %v240 = vadd.s32 %v239, 127
    %v241 = vshll.u32 %v240, 23
    %v242 = vor.u32 4788187, %v241
    %v243 = vand.u32 2147483647, %v242
    %v245 = vcvt.s32.f32 %v238
    %v246 = vmul.f32 %v245, %v243
    %v247 = vxor.u32 %v246, 2147483648
    %v248 = vsel %vm165, %v247, %v246
    %v249 = vsub.s32 4, %v225
    %v250 = vsel %vm165, %v249, %v225
    %v251 = vsel %vm164, %v45, %v248
    %v252 = vsel %vm164, 0, %v250
    %v253 = vcosq.f32.pop %v251
    %v254 = vsinq.f32.pop %v251
    %vm255 = vweird.f32 %v45
    %v256 = vand.u32 %v252, 3
    %vm257 = vcmp.lt.s32.totalorder %v256, 2
    %vm258 = vcmp.eq.s32.totalorder %v256, 0
    %v259 = vxor.u32 %v254, 2147483648
    %v260 = vsel %vm258, %v253, %v259
    %vm261 = vcmp.eq.s32.totalorder %v256, 2
    %v262 = vxor.u32 %v253, 2147483648
    %v263 = vsel %vm261, %v262, %v254
    %v264 = vsel %vm257, %v260, %v263
    %v265 = vsel %vm255, nan, %v264
    %v266 = vand.u32 2147483647, %v46
    %vm267 = vcmp.le.f32.partialorder %v266, 0.7853982
    %vm268 = vcmp.lt.s32.totalorder %v46, 0
    %v269 = vand.u32 %v46, 2139095040
    %v270 = vshrl.u32 %v269, 23
    %v271 = vsub.s32 %v270, 127
    %v272 = vand.u32 2147483647, %v46
    %v273 = vand.u32 %v272, 8388607
    %v274 = vor.u32 %v273, 8388608
    %v275 = vsub.s32 0, %v274
    %v276 = vadd.s32 %v271, 1
    %vm277 = vcmp.gt.s32.totalorder %v276, 0
    %v278 = vsel %vm277, %v276, 0
    %v279 = vshrl.u32 %v278, 5
    %v280 = vand.u32 %v278, 31
    %v281 = vsub.s32 32, %v280
    %v282 = vshrl.u32 683565275, %v281
    %v283 = vshll.u32 683565275, %v280
    %v284 = vshrl.u32 2475754826, %v281
    %v285 = vor.u32 %v283, %v284
    %v286 = vshll.u32 2475754826, %v280
    %v287 = vshrl.u32 2131351028, %v281
    %v288 = vor.u32 %v286, %v287
    %v289 = vshll.u32 2131351028, %v280
    %v290 = vshrl.u32 2102212464, %v281
    %v291 = vor.u32 %v289, %v290
    %v292 = vshll.u32 2102212464, %v280
    %v293 = vshrl.u32 920167782, %v281
    %v294 = vor.u32 %v292, %v293
    %v295 = vshll.u32 920167782, %v280
    %v296 = vshrl.u32 1326507024, %v281
    %v297 = vor.u32 %v295, %v296
    %vm298 = vcmp.lt.s32.totalorder %v279, 1
    %vm299 = vcmp.lt.s32.totalorder %v279, 2
    %vm300 = vcmp.lt.s32.totalorder %v279, 3
    %vm301 = vcmp.lt.s32.totalorder %v279, 4
    %v302 = vsel %vm298, %v282, %v285
    %v303 = vsel %vm301, %v291, 2102212464
    %v304 = vsel %vm300, %v288, %v303
    %v305 = vsel %vm299, %v302, %v304
    %v306 = vsel %vm298, %v285, %v288
    %v307 = vsel %vm301, %v294, 920167782
    %v308 = vsel %vm300, %v291, %v307
    %v309 = vsel %vm299, %v306, %v308
    %v310 = vsel %vm298, %v288, %v291
    %v311 = vsel %vm301, %v297, 1326507024
    %v312 = vsel %vm300, %v294, %v311
    %v313 = vsel %vm299, %v310, %v312
    %v314 = vshll.u32 %v274, 8
    %v315 = vmul.u32.u64.compose %v314, %v313
    %v316 = vextract.low.u32 %v315
    %v317 = vextract.high.u32 %v315
    %v318 = vmul.u32.u64.compose %v314, %v309
    %v319 = vextract.low.u32 %v318
    %v320 = vextract.high.u32 %v318
    %v321 = vmul.u32 %v314, %v305
    %v322 = vadd.s32 %v317, %v319
    %vm323 = vc.u32 %v317, %v319
    %v324 = vadd.s32 %v320, 1
    %v325 = vsel %vm323, %v324, %v320
    %v326 = vadd.s32 %v321, %v325
    %v327 = vadd.s32 %v326, 536870912
    %v328 = vshrl.u32 %v327, 30
    %v329 = vshll.u32 %v328, 30
    %v330 = vsub.s32 %v326, %v329
    %vm331 = vcmp.lt.s32.totalorder %v330, 0
    %v332 = vsub.s32 0, %v330
    %v333 = vsel %vm331, %v332, %v330
    %v334 = vclz %v333
    %v335 = vsub.s32 %v334, 2
    %vm336 = vcmp.gt.s32.totalorder 0, %v335
    %v337 = vsel %vm336, 0, %v335
    %v338 = vsub.s32 32, %v337
    %v339 = vshll.u32 %v330, %v337
    %v340 = vshrl.u32 %v322, %v338
    %v341 = vor.u32 %v339, %v340
    %v342 = vsub.s32 4294967266, %v337
    %v343 = vadd.s32 %v342, 127
    %v344 = vshll.u32 %v343, 23
    %v345 = vor.u32 4788187, %v344
    %v346 = vand.u32 2147483647, %v345
    %v348 = vcvt.s32.f32 %v341
    %v349 = vmul.f32 %v348, %v346
    %v350 = vxor.u32 %v349, 2147483648
    %v351 = vsel %vm268, %v350, %v349
    %v352 = vsub.s32 4, %v328
    %v353 = vsel %vm268, %v352, %v328
    %v354 = vsel %vm267, %v46, %v351
    %v355 = vsel %vm267, 0, %v353
    %v356 = vcosq.f32.pop %v354
    %v357 = vsinq.f32.pop %v354
    %vm358 = vweird.f32 %v46
    %v359 = vand.u32 %v355, 3
    %vm360 = vcmp.lt.s32.totalorder %v359, 2
    %vm361 = vcmp.eq.s32.totalorder %v359, 0
    %v362 = vxor.u32 %v357, 2147483648
    %v363 = vsel %vm361, %v356, %v362
    %vm364 = vcmp.eq.s32.totalorder %v359, 2
    %v365 = vxor.u32 %v356, 2147483648
    %v366 = vsel %vm364, %v365, %v357
    %v367 = vsel %vm360, %v363, %v366
    %v368 = vsel %vm358, nan, %v367
    %v369 = vand.u32 2147483647, %v47
    %vm370 = vcmp.le.f32.partialorder %v369, 0.7853982
    %vm371 = vcmp.lt.s32.totalorder %v47, 0
    %v372 = vand.u32 %v47, 2139095040
    %v373 = vshrl.u32 %v372, 23
    %v374 = vsub.s32 %v373, 127
    %v375 = vand.u32 2147483647, %v47
    %v376 = vand.u32 %v375, 8388607
    %v377 = vor.u32 %v376, 8388608
    %v378 = vsub.s32 0, %v377
    %v379 = vadd.s32 %v374, 1
    %vm380 = vcmp.gt.s32.totalorder %v379, 0
    %v381 = vsel %vm380, %v379, 0
    %v382 = vshrl.u32 %v381, 5
    %v383 = vand.u32 %v381, 31
    %v384 = vsub.s32 32, %v383
    %v385 = vshrl.u32 683565275, %v384
    %v386 = vshll.u32 683565275, %v383
    %v387 = vshrl.u32 2475754826, %v384
    %v388 = vor.u32 %v386, %v387
    %v389 = vshll.u32 2475754826, %v383
    %v390 = vshrl.u32 2131351028, %v384
    %v391 = vor.u32 %v389, %v390
    %v392 = vshll.u32 2131351028, %v383
    %v393 = vshrl.u32 2102212464, %v384
    %v394 = vor.u32 %v392, %v393
    %v395 = vshll.u32 2102212464, %v383
    %v396 = vshrl.u32 920167782, %v384
    %v397 = vor.u32 %v395, %v396
    %v398 = vshll.u32 920167782, %v383
    %v399 = vshrl.u32 1326507024, %v384
    %v400 = vor.u32 %v398, %v399
    %vm401 = vcmp.lt.s32.totalorder %v382, 1
    %vm402 = vcmp.lt.s32.totalorder %v382, 2
    %vm403 = vcmp.lt.s32.totalorder %v382, 3
    %vm404 = vcmp.lt.s32.totalorder %v382, 4
    %v405 = vsel %vm401, %v385, %v388
    %v406 = vsel %vm404, %v394, 2102212464
    %v407 = vsel %vm403, %v391, %v406
    %v408 = vsel %vm402, %v405, %v407
    %v409 = vsel %vm401, %v388, %v391
    %v410 = vsel %vm404, %v397, 920167782
    %v411 = vsel %vm403, %v394, %v410
    %v412 = vsel %vm402, %v409, %v411
    %v413 = vsel %vm401, %v391, %v394
    %v414 = vsel %vm404, %v400, 1326507024
    %v415 = vsel %vm403, %v397, %v414
    %v416 = vsel %vm402, %v413, %v415
    %v417 = vshll.u32 %v377, 8
    %v418 = vmul.u32.u64.compose %v417, %v416
    %v419 = vextract.low.u32 %v418
    %v420 = vextract.high.u32 %v418
    %v421 = vmul.u32.u64.compose %v417, %v412
    %v422 = vextract.low.u32 %v421
    %v423 = vextract.high.u32 %v421
    %v424 = vmul.u32 %v417, %v408
    %v425 = vadd.s32 %v420, %v422
    %vm426 = vc.u32 %v420, %v422
    %v427 = vadd.s32 %v423, 1
    %v428 = vsel %vm426, %v427, %v423
    %v429 = vadd.s32 %v424, %v428
    %v430 = vadd.s32 %v429, 536870912
    %v431 = vshrl.u32 %v430, 30
    %v432 = vshll.u32 %v431, 30
    %v433 = vsub.s32 %v429, %v432
    %vm434 = vcmp.lt.s32.totalorder %v433, 0
    %v435 = vsub.s32 0, %v433
    %v436 = vsel %vm434, %v435, %v433
    %v437 = vclz %v436
    %v438 = vsub.s32 %v437, 2
    %vm439 = vcmp.gt.s32.totalorder 0, %v438
    %v440 = vsel %vm439, 0, %v438
    %v441 = vsub.s32 32, %v440
    %v442 = vshll.u32 %v433, %v440
    %v443 = vshrl.u32 %v425, %v441
    %v444 = vor.u32 %v442, %v443
    %v445 = vsub.s32 4294967266, %v440
    %v446 = vadd.s32 %v445, 127
    %v447 = vshll.u32 %v446, 23
    %v448 = vor.u32 4788187, %v447
    %v449 = vand.u32 2147483647, %v448
    %v451 = vcvt.s32.f32 %v444
    %v452 = vmul.f32 %v451, %v449
    %v453 = vxor.u32 %v452, 2147483648
    %v454 = vsel %vm371, %v453, %v452
    %v455 = vsub.s32 4, %v431
    %v456 = vsel %vm371, %v455, %v431
    %v457 = vsel %vm370, %v47, %v454
    %v458 = vsel %vm370, 0, %v456
    %v459 = vcosq.f32.pop %v457
    %v460 = vsinq.f32.pop %v457
    %vm461 = vweird.f32 %v47
    %v462 = vand.u32 %v458, 3
    %vm463 = vcmp.lt.s32.totalorder %v462, 2
    %vm464 = vcmp.eq.s32.totalorder %v462, 0
    %v465 = vxor.u32 %v460, 2147483648
    %v466 = vsel %vm464, %v459, %v465
    %vm467 = vcmp.eq.s32.totalorder %v462, 2
    %v468 = vxor.u32 %v459, 2147483648
    %v469 = vsel %vm467, %v468, %v460
    %v470 = vsel %vm463, %v466, %v469
    %v471 = vsel %vm461, nan, %v470
    %v472 = vand.u32 2147483647, %v48
    %vm473 = vcmp.le.f32.partialorder %v472, 0.7853982
    %vm474 = vcmp.lt.s32.totalorder %v48, 0
    %v475 = vand.u32 %v48, 2139095040
    %v476 = vshrl.u32 %v475, 23
    %v477 = vsub.s32 %v476, 127
    %v478 = vand.u32 2147483647, %v48
    %v479 = vand.u32 %v478, 8388607
    %v480 = vor.u32 %v479, 8388608
    %v481 = vsub.s32 0, %v480
    %v482 = vadd.s32 %v477, 1
    %vm483 = vcmp.gt.s32.totalorder %v482, 0
    %v484 = vsel %vm483, %v482, 0
    %v485 = vshrl.u32 %v484, 5
    %v486 = vand.u32 %v484, 31
    %v487 = vsub.s32 32, %v486
    %v488 = vshrl.u32 683565275, %v487
    %v489 = vshll.u32 683565275, %v486
    %v490 = vshrl.u32 2475754826, %v487
    %v491 = vor.u32 %v489, %v490
    %v492 = vshll.u32 2475754826, %v486
    %v493 = vshrl.u32 2131351028, %v487
    %v494 = vor.u32 %v492, %v493
    %v495 = vshll.u32 2131351028, %v486
    %v496 = vshrl.u32 2102212464, %v487
    %v497 = vor.u32 %v495, %v496
    %v498 = vshll.u32 2102212464, %v486
    %v499 = vshrl.u32 920167782, %v487
    %v500 = vor.u32 %v498, %v499
    %v501 = vshll.u32 920167782, %v486
    %v502 = vshrl.u32 1326507024, %v487
    %v503 = vor.u32 %v501, %v502
    %vm504 = vcmp.lt.s32.totalorder %v485, 1
    %vm505 = vcmp.lt.s32.totalorder %v485, 2
    %vm506 = vcmp.lt.s32.totalorder %v485, 3
    %vm507 = vcmp.lt.s32.totalorder %v485, 4
    %v508 = vsel %vm504, %v488, %v491
    %v509 = vsel %vm507, %v497, 2102212464
    %v510 = vsel %vm506, %v494, %v509
    %v511 = vsel %vm505, %v508, %v510
    %v512 = vsel %vm504, %v491, %v494
    %v513 = vsel %vm507, %v500, 920167782
    %v514 = vsel %vm506, %v497, %v513
    %v515 = vsel %vm505, %v512, %v514
    %v516 = vsel %vm504, %v494, %v497
    %v517 = vsel %vm507, %v503, 1326507024
    %v518 = vsel %vm506, %v500, %v517
    %v519 = vsel %vm505, %v516, %v518
    %v520 = vshll.u32 %v480, 8
    %v521 = vmul.u32.u64.compose %v520, %v519
    %v522 = vextract.low.u32 %v521
    %v523 = vextract.high.u32 %v521
    %v524 = vmul.u32.u64.compose %v520, %v515
    %v525 = vextract.low.u32 %v524
    %v526 = vextract.high.u32 %v524
    %v527 = vmul.u32 %v520, %v511
    %v528 = vadd.s32 %v523, %v525
    %vm529 = vc.u32 %v523, %v525
    %v530 = vadd.s32 %v526, 1
    %v531 = vsel %vm529, %v530, %v526
    %v532 = vadd.s32 %v527, %v531
    %v533 = vadd.s32 %v532, 536870912
    %v534 = vshrl.u32 %v533, 30
    %v535 = vshll.u32 %v534, 30
    %v536 = vsub.s32 %v532, %v535
    %vm537 = vcmp.lt.s32.totalorder %v536, 0
    %v538 = vsub.s32 0, %v536
    %v539 = vsel %vm537, %v538, %v536
    %v540 = vclz %v539
    %v541 = vsub.s32 %v540, 2
    %vm542 = vcmp.gt.s32.totalorder 0, %v541
    %v543 = vsel %vm542, 0, %v541
    %v544 = vsub.s32 32, %v543
    %v545 = vshll.u32 %v536, %v543
    %v546 = vshrl.u32 %v528, %v544
    %v547 = vor.u32 %v545, %v546
    %v548 = vsub.s32 4294967266, %v543
    %v549 = vadd.s32 %v548, 127
    %v550 = vshll.u32 %v549, 23
    %v551 = vor.u32 4788187, %v550
    %v552 = vand.u32 2147483647, %v551
    %v554 = vcvt.s32.f32 %v547
    %v555 = vmul.f32 %v554, %v552
    %v556 = vxor.u32 %v555, 2147483648
    %v557 = vsel %vm474, %v556, %v555
    %v558 = vsub.s32 4, %v534
    %v559 = vsel %vm474, %v558, %v534
    %v560 = vsel %vm473, %v48, %v557
    %v561 = vsel %vm473, 0, %v559
    %v562 = vcosq.f32.pop %v560
    %v563 = vsinq.f32.pop %v560
    %vm564 = vweird.f32 %v48
    %v565 = vand.u32 %v561, 3
    %vm566 = vcmp.lt.s32.totalorder %v565, 2
    %vm567 = vcmp.eq.s32.totalorder %v565, 0
    %v568 = vxor.u32 %v563, 2147483648
    %v569 = vsel %vm567, %v562, %v568
    %vm570 = vcmp.eq.s32.totalorder %v565, 2
    %v571 = vxor.u32 %v562, 2147483648
    %v572 = vsel %vm570, %v571, %v563
    %v573 = vsel %vm566, %v569, %v572
    %v574 = vsel %vm564, nan, %v573
    %v575 = vand.u32 2147483647, %v49
    %vm576 = vcmp.le.f32.partialorder %v575, 0.7853982
    %vm577 = vcmp.lt.s32.totalorder %v49, 0
    %v578 = vand.u32 %v49, 2139095040
    %v579 = vshrl.u32 %v578, 23
    %v580 = vsub.s32 %v579, 127
    %v581 = vand.u32 2147483647, %v49
    %v582 = vand.u32 %v581, 8388607
    %v583 = vor.u32 %v582, 8388608
    %v584 = vsub.s32 0, %v583
    %v585 = vadd.s32 %v580, 1
    %vm586 = vcmp.gt.s32.totalorder %v585, 0
    %v587 = vsel %vm586, %v585, 0
    %v588 = vshrl.u32 %v587, 5
    %v589 = vand.u32 %v587, 31
    %v590 = vsub.s32 32, %v589
    %v591 = vshrl.u32 683565275, %v590
    %v592 = vshll.u32 683565275, %v589
    %v593 = vshrl.u32 2475754826, %v590
    %v594 = vor.u32 %v592, %v593
    %v595 = vshll.u32 2475754826, %v589
    %v596 = vshrl.u32 2131351028, %v590
    %v597 = vor.u32 %v595, %v596
    %v598 = vshll.u32 2131351028, %v589
    %v599 = vshrl.u32 2102212464, %v590
    %v600 = vor.u32 %v598, %v599
    %v601 = vshll.u32 2102212464, %v589
    %v602 = vshrl.u32 920167782, %v590
    %v603 = vor.u32 %v601, %v602
    %v604 = vshll.u32 920167782, %v589
    %v605 = vshrl.u32 1326507024, %v590
    %v606 = vor.u32 %v604, %v605
    %vm607 = vcmp.lt.s32.totalorder %v588, 1
    %vm608 = vcmp.lt.s32.totalorder %v588, 2
    %vm609 = vcmp.lt.s32.totalorder %v588, 3
    %vm610 = vcmp.lt.s32.totalorder %v588, 4
    %v611 = vsel %vm607, %v591, %v594
    %v612 = vsel %vm610, %v600, 2102212464
    %v613 = vsel %vm609, %v597, %v612
    %v614 = vsel %vm608, %v611, %v613
    %v615 = vsel %vm607, %v594, %v597
    %v616 = vsel %vm610, %v603, 920167782
    %v617 = vsel %vm609, %v600, %v616
    %v618 = vsel %vm608, %v615, %v617
    %v619 = vsel %vm607, %v597, %v600
    %v620 = vsel %vm610, %v606, 1326507024
    %v621 = vsel %vm609, %v603, %v620
    %v622 = vsel %vm608, %v619, %v621
    %v623 = vshll.u32 %v583, 8
    %v624 = vmul.u32.u64.compose %v623, %v622
    %v625 = vextract.low.u32 %v624
    %v626 = vextract.high.u32 %v624
    %v627 = vmul.u32.u64.compose %v623, %v618
    %v628 = vextract.low.u32 %v627
    %v629 = vextract.high.u32 %v627
    %v630 = vmul.u32 %v623, %v614
    %v631 = vadd.s32 %v626, %v628
    %vm632 = vc.u32 %v626, %v628
    %v633 = vadd.s32 %v629, 1
    %v634 = vsel %vm632, %v633, %v629
    %v635 = vadd.s32 %v630, %v634
    %v636 = vadd.s32 %v635, 536870912
    %v637 = vshrl.u32 %v636, 30
    %v638 = vshll.u32 %v637, 30
    %v639 = vsub.s32 %v635, %v638
    %vm640 = vcmp.lt.s32.totalorder %v639, 0
    %v641 = vsub.s32 0, %v639
    %v642 = vsel %vm640, %v641, %v639
    %v643 = vclz %v642
    %v644 = vsub.s32 %v643, 2
    %vm645 = vcmp.gt.s32.totalorder 0, %v644
    %v646 = vsel %vm645, 0, %v644
    %v647 = vsub.s32 32, %v646
    %v648 = vshll.u32 %v639, %v646
    %v649 = vshrl.u32 %v631, %v647
    %v650 = vor.u32 %v648, %v649
    %v651 = vsub.s32 4294967266, %v646
    %v652 = vadd.s32 %v651, 127
    %v653 = vshll.u32 %v652, 23
    %v654 = vor.u32 4788187, %v653
    %v655 = vand.u32 2147483647, %v654
    %v657 = vcvt.s32.f32 %v650
    %v658 = vmul.f32 %v657, %v655
    %v659 = vxor.u32 %v658, 2147483648
    %v660 = vsel %vm577, %v659, %v658
    %v661 = vsub.s32 4, %v637
    %v662 = vsel %vm577, %v661, %v637
    %v663 = vsel %vm576, %v49, %v660
    %v664 = vsel %vm576, 0, %v662
    %v665 = vcosq.f32.pop %v663
    %v666 = vsinq.f32.pop %v663
    %vm667 = vweird.f32 %v49
    %v668 = vand.u32 %v664, 3
    %vm669 = vcmp.lt.s32.totalorder %v668, 2
    %vm670 = vcmp.eq.s32.totalorder %v668, 0
    %v671 = vxor.u32 %v666, 2147483648
    %v672 = vsel %vm670, %v665, %v671
    %vm673 = vcmp.eq.s32.totalorder %v668, 2
    %v674 = vxor.u32 %v665, 2147483648
    %v675 = vsel %vm673, %v674, %v666
    %v676 = vsel %vm669, %v672, %v675
    %v677 = vsel %vm667, nan, %v676
    %v678 = vand.u32 2147483647, %v50
    %vm679 = vcmp.le.f32.partialorder %v678, 0.7853982
    %vm680 = vcmp.lt.s32.totalorder %v50, 0
    %v681 = vand.u32 %v50, 2139095040
    %v682 = vshrl.u32 %v681, 23
    %v683 = vsub.s32 %v682, 127
    %v684 = vand.u32 2147483647, %v50
    %v685 = vand.u32 %v684, 8388607
    %v686 = vor.u32 %v685, 8388608
    %v687 = vsub.s32 0, %v686
    %v688 = vadd.s32 %v683, 1
    %vm689 = vcmp.gt.s32.totalorder %v688, 0
    %v690 = vsel %vm689, %v688, 0
    %v691 = vshrl.u32 %v690, 5
    %v692 = vand.u32 %v690, 31
    %v693 = vsub.s32 32, %v692
    %v694 = vshrl.u32 683565275, %v693
    %v695 = vshll.u32 683565275, %v692
    %v696 = vshrl.u32 2475754826, %v693
    %v697 = vor.u32 %v695, %v696
    %v698 = vshll.u32 2475754826, %v692
    %v699 = vshrl.u32 2131351028, %v693
    %v700 = vor.u32 %v698, %v699
    %v701 = vshll.u32 2131351028, %v692
    %v702 = vshrl.u32 2102212464, %v693
    %v703 = vor.u32 %v701, %v702
    %v704 = vshll.u32 2102212464, %v692
    %v705 = vshrl.u32 920167782, %v693
    %v706 = vor.u32 %v704, %v705
    %v707 = vshll.u32 920167782, %v692
    %v708 = vshrl.u32 1326507024, %v693
    %v709 = vor.u32 %v707, %v708
    %vm710 = vcmp.lt.s32.totalorder %v691, 1
    %vm711 = vcmp.lt.s32.totalorder %v691, 2
    %vm712 = vcmp.lt.s32.totalorder %v691, 3
    %vm713 = vcmp.lt.s32.totalorder %v691, 4
    %v714 = vsel %vm710, %v694, %v697
    %v715 = vsel %vm713, %v703, 2102212464
    %v716 = vsel %vm712, %v700, %v715
    %v717 = vsel %vm711, %v714, %v716
    %v718 = vsel %vm710, %v697, %v700
    %v719 = vsel %vm713, %v706, 920167782
    %v720 = vsel %vm712, %v703, %v719
    %v721 = vsel %vm711, %v718, %v720
    %v722 = vsel %vm710, %v700, %v703
    %v723 = vsel %vm713, %v709, 1326507024
    %v724 = vsel %vm712, %v706, %v723
    %v725 = vsel %vm711, %v722, %v724
    %v726 = vshll.u32 %v686, 8
    %v727 = vmul.u32.u64.compose %v726, %v725
    %v728 = vextract.low.u32 %v727
    %v729 = vextract.high.u32 %v727
    %v730 = vmul.u32.u64.compose %v726, %v721
    %v731 = vextract.low.u32 %v730
    %v732 = vextract.high.u32 %v730
    %v733 = vmul.u32 %v726, %v717
    %v734 = vadd.s32 %v729, %v731
    %vm735 = vc.u32 %v729, %v731
    %v736 = vadd.s32 %v732, 1
    %v737 = vsel %vm735, %v736, %v732
    %v738 = vadd.s32 %v733, %v737
    %v739 = vadd.s32 %v738, 536870912
    %v740 = vshrl.u32 %v739, 30
    %v741 = vshll.u32 %v740, 30
    %v742 = vsub.s32 %v738, %v741
    %vm743 = vcmp.lt.s32.totalorder %v742, 0
    %v744 = vsub.s32 0, %v742
    %v745 = vsel %vm743, %v744, %v742
    %v746 = vclz %v745
    %v747 = vsub.s32 %v746, 2
    %vm748 = vcmp.gt.s32.totalorder 0, %v747
    %v749 = vsel %vm748, 0, %v747
    %v750 = vsub.s32 32, %v749
    %v751 = vshll.u32 %v742, %v749
    %v752 = vshrl.u32 %v734, %v750
    %v753 = vor.u32 %v751, %v752
    %v754 = vsub.s32 4294967266, %v749
    %v755 = vadd.s32 %v754, 127
    %v756 = vshll.u32 %v755, 23
    %v757 = vor.u32 4788187, %v756
    %v758 = vand.u32 2147483647, %v757
    %v760 = vcvt.s32.f32 %v753
    %v761 = vmul.f32 %v760, %v758
    %v762 = vxor.u32 %v761, 2147483648
    %v763 = vsel %vm680, %v762, %v761
    %v764 = vsub.s32 4, %v740
    %v765 = vsel %vm680, %v764, %v740
    %v766 = vsel %vm679, %v50, %v763
    %v767 = vsel %vm679, 0, %v765
    %v768 = vcosq.f32.pop %v766
    %v769 = vsinq.f32.pop %v766
    %vm770 = vweird.f32 %v50
    %v771 = vand.u32 %v767, 3
    %vm772 = vcmp.lt.s32.totalorder %v771, 2
    %vm773 = vcmp.eq.s32.totalorder %v771, 0
    %v774 = vxor.u32 %v769, 2147483648
    %v775 = vsel %vm773, %v768, %v774
    %vm776 = vcmp.eq.s32.totalorder %v771, 2
    %v777 = vxor.u32 %v768, 2147483648
    %v778 = vsel %vm776, %v777, %v769
    %v779 = vsel %vm772, %v775, %v778
    %v780 = vsel %vm770, nan, %v779
    %v781 = vand.u32 2147483647, %v51
    %vm782 = vcmp.le.f32.partialorder %v781, 0.7853982
    %vm783 = vcmp.lt.s32.totalorder %v51, 0
    %v784 = vand.u32 %v51, 2139095040
    %v785 = vshrl.u32 %v784, 23
    %v786 = vsub.s32 %v785, 127
    %v787 = vand.u32 2147483647, %v51
    %v788 = vand.u32 %v787, 8388607
    %v789 = vor.u32 %v788, 8388608
    %v790 = vsub.s32 0, %v789
    %v791 = vadd.s32 %v786, 1
    %vm792 = vcmp.gt.s32.totalorder %v791, 0
    %v793 = vsel %vm792, %v791, 0
    %v794 = vshrl.u32 %v793, 5
    %v795 = vand.u32 %v793, 31
    %v796 = vsub.s32 32, %v795
    %v797 = vshrl.u32 683565275, %v796
    %v798 = vshll.u32 683565275, %v795
    %v799 = vshrl.u32 2475754826, %v796
    %v800 = vor.u32 %v798, %v799
    %v801 = vshll.u32 2475754826, %v795
    %v802 = vshrl.u32 2131351028, %v796
    %v803 = vor.u32 %v801, %v802
    %v804 = vshll.u32 2131351028, %v795
    %v805 = vshrl.u32 2102212464, %v796
    %v806 = vor.u32 %v804, %v805
    %v807 = vshll.u32 2102212464, %v795
    %v808 = vshrl.u32 920167782, %v796
    %v809 = vor.u32 %v807, %v808
    %v810 = vshll.u32 920167782, %v795
    %v811 = vshrl.u32 1326507024, %v796
    %v812 = vor.u32 %v810, %v811
    %vm813 = vcmp.lt.s32.totalorder %v794, 1
    %vm814 = vcmp.lt.s32.totalorder %v794, 2
    %vm815 = vcmp.lt.s32.totalorder %v794, 3
    %vm816 = vcmp.lt.s32.totalorder %v794, 4
    %v817 = vsel %vm813, %v797, %v800
    %v818 = vsel %vm816, %v806, 2102212464
    %v819 = vsel %vm815, %v803, %v818
    %v820 = vsel %vm814, %v817, %v819
    %v821 = vsel %vm813, %v800, %v803
    %v822 = vsel %vm816, %v809, 920167782
    %v823 = vsel %vm815, %v806, %v822
    %v824 = vsel %vm814, %v821, %v823
    %v825 = vsel %vm813, %v803, %v806
    %v826 = vsel %vm816, %v812, 1326507024
    %v827 = vsel %vm815, %v809, %v826
    %v828 = vsel %vm814, %v825, %v827
    %v829 = vshll.u32 %v789, 8
    %v830 = vmul.u32.u64.compose %v829, %v828
    %v831 = vextract.low.u32 %v830
    %v832 = vextract.high.u32 %v830
    %v833 = vmul.u32.u64.compose %v829, %v824
    %v834 = vextract.low.u32 %v833
    %v835 = vextract.high.u32 %v833
    %v836 = vmul.u32 %v829, %v820
    %v837 = vadd.s32 %v832, %v834
    %vm838 = vc.u32 %v832, %v834
    %v839 = vadd.s32 %v835, 1
    %v840 = vsel %vm838, %v839, %v835
    %v841 = vadd.s32 %v836, %v840
    %v842 = vadd.s32 %v841, 536870912
    %v843 = vshrl.u32 %v842, 30
    %v844 = vshll.u32 %v843, 30
    %v845 = vsub.s32 %v841, %v844
    %vm846 = vcmp.lt.s32.totalorder %v845, 0
    %v847 = vsub.s32 0, %v845
    %v848 = vsel %vm846, %v847, %v845
    %v849 = vclz %v848
    %v850 = vsub.s32 %v849, 2
    %vm851 = vcmp.gt.s32.totalorder 0, %v850
    %v852 = vsel %vm851, 0, %v850
    %v853 = vsub.s32 32, %v852
    %v854 = vshll.u32 %v845, %v852
    %v855 = vshrl.u32 %v837, %v853
    %v856 = vor.u32 %v854, %v855
    %v857 = vsub.s32 4294967266, %v852
    %v858 = vadd.s32 %v857, 127
    %v859 = vshll.u32 %v858, 23
    %v860 = vor.u32 4788187, %v859
    %v861 = vand.u32 2147483647, %v860
    %v863 = vcvt.s32.f32 %v856
    %v864 = vmul.f32 %v863, %v861
    %v865 = vxor.u32 %v864, 2147483648
    %v866 = vsel %vm783, %v865, %v864
    %v867 = vsub.s32 4, %v843
    %v868 = vsel %vm783, %v867, %v843
    %v869 = vsel %vm782, %v51, %v866
    %v870 = vsel %vm782, 0, %v868
    %v871 = vcosq.f32.pop %v869
    %v872 = vsinq.f32.pop %v869
    %vm873 = vweird.f32 %v51
    %v874 = vand.u32 %v870, 3
    %vm875 = vcmp.lt.s32.totalorder %v874, 2
    %vm876 = vcmp.eq.s32.totalorder %v874, 0
    %v877 = vxor.u32 %v872, 2147483648
    %v878 = vsel %vm876, %v871, %v877
    %vm879 = vcmp.eq.s32.totalorder %v874, 2
    %v880 = vxor.u32 %v871, 2147483648
    %v881 = vsel %vm879, %v880, %v872
    %v882 = vsel %vm875, %v878, %v881
    %v883 = vsel %vm873, nan, %v882
    %v884 = vand.u32 2147483647, %v52
    %vm885 = vcmp.le.f32.partialorder %v884, 0.7853982
    %vm886 = vcmp.lt.s32.totalorder %v52, 0
    %v887 = vand.u32 %v52, 2139095040
    %v888 = vshrl.u32 %v887, 23
    %v889 = vsub.s32 %v888, 127
    %v890 = vand.u32 2147483647, %v52
    %v891 = vand.u32 %v890, 8388607
    %v892 = vor.u32 %v891, 8388608
    %v893 = vsub.s32 0, %v892
    %v894 = vadd.s32 %v889, 1
    %vm895 = vcmp.gt.s32.totalorder %v894, 0
    %v896 = vsel %vm895, %v894, 0
    %v897 = vshrl.u32 %v896, 5
    %v898 = vand.u32 %v896, 31
    %v899 = vsub.s32 32, %v898
    %v900 = vshrl.u32 683565275, %v899
    %v901 = vshll.u32 683565275, %v898
    %v902 = vshrl.u32 2475754826, %v899
    %v903 = vor.u32 %v901, %v902
    %v904 = vshll.u32 2475754826, %v898
    %v905 = vshrl.u32 2131351028, %v899
    %v906 = vor.u32 %v904, %v905
    %v907 = vshll.u32 2131351028, %v898
    %v908 = vshrl.u32 2102212464, %v899
    %v909 = vor.u32 %v907, %v908
    %v910 = vshll.u32 2102212464, %v898
    %v911 = vshrl.u32 920167782, %v899
    %v912 = vor.u32 %v910, %v911
    %v913 = vshll.u32 920167782, %v898
    %v914 = vshrl.u32 1326507024, %v899
    %v915 = vor.u32 %v913, %v914
    %vm916 = vcmp.lt.s32.totalorder %v897, 1
    %vm917 = vcmp.lt.s32.totalorder %v897, 2
    %vm918 = vcmp.lt.s32.totalorder %v897, 3
    %vm919 = vcmp.lt.s32.totalorder %v897, 4
    %v920 = vsel %vm916, %v900, %v903
    %v921 = vsel %vm919, %v909, 2102212464
    %v922 = vsel %vm918, %v906, %v921
    %v923 = vsel %vm917, %v920, %v922
    %v924 = vsel %vm916, %v903, %v906
    %v925 = vsel %vm919, %v912, 920167782
    %v926 = vsel %vm918, %v909, %v925
    %v927 = vsel %vm917, %v924, %v926
    %v928 = vsel %vm916, %v906, %v909
    %v929 = vsel %vm919, %v915, 1326507024
    %v930 = vsel %vm918, %v912, %v929
    %v931 = vsel %vm917, %v928, %v930
    %v932 = vshll.u32 %v892, 8
    %v933 = vmul.u32.u64.compose %v932, %v931
    %v934 = vextract.low.u32 %v933
    %v935 = vextract.high.u32 %v933
    %v936 = vmul.u32.u64.compose %v932, %v927
    %v937 = vextract.low.u32 %v936
    %v938 = vextract.high.u32 %v936
    %v939 = vmul.u32 %v932, %v923
    %v940 = vadd.s32 %v935, %v937
    %vm941 = vc.u32 %v935, %v937
    %v942 = vadd.s32 %v938, 1
    %v943 = vsel %vm941, %v942, %v938
    %v944 = vadd.s32 %v939, %v943
    %v945 = vadd.s32 %v944, 536870912
    %v946 = vshrl.u32 %v945, 30
    %v947 = vshll.u32 %v946, 30
    %v948 = vsub.s32 %v944, %v947
    %vm949 = vcmp.lt.s32.totalorder %v948, 0
    %v950 = vsub.s32 0, %v948
    %v951 = vsel %vm949, %v950, %v948
    %v952 = vclz %v951
    %v953 = vsub.s32 %v952, 2
    %vm954 = vcmp.gt.s32.totalorder 0, %v953
    %v955 = vsel %vm954, 0, %v953
    %v956 = vsub.s32 32, %v955
    %v957 = vshll.u32 %v948, %v955
    %v958 = vshrl.u32 %v940, %v956
    %v959 = vor.u32 %v957, %v958
    %v960 = vsub.s32 4294967266, %v955
    %v961 = vadd.s32 %v960, 127
    %v962 = vshll.u32 %v961, 23
    %v963 = vor.u32 4788187, %v962
    %v964 = vand.u32 2147483647, %v963
    %v966 = vcvt.s32.f32 %v959
    %v967 = vmul.f32 %v966, %v964
    %v968 = vxor.u32 %v967, 2147483648
    %v969 = vsel %vm886, %v968, %v967
    %v970 = vsub.s32 4, %v946
    %v971 = vsel %vm886, %v970, %v946
    %v972 = vsel %vm885, %v52, %v969
    %v973 = vsel %vm885, 0, %v971
    %v974 = vcosq.f32.pop %v972
    %v975 = vsinq.f32.pop %v972
    %vm976 = vweird.f32 %v52
    %v977 = vand.u32 %v973, 3
    %vm978 = vcmp.lt.s32.totalorder %v977, 2
    %vm979 = vcmp.eq.s32.totalorder %v977, 0
    %v980 = vxor.u32 %v975, 2147483648
    %v981 = vsel %vm979, %v974, %v980
    %vm982 = vcmp.eq.s32.totalorder %v977, 2
    %v983 = vxor.u32 %v974, 2147483648
    %v984 = vsel %vm982, %v983, %v975
    %v985 = vsel %vm978, %v981, %v984
    %v986 = vsel %vm976, nan, %v985
    %v987 = vand.u32 2147483647, %v53
    %vm988 = vcmp.le.f32.partialorder %v987, 0.7853982
    %vm989 = vcmp.lt.s32.totalorder %v53, 0
    %v990 = vand.u32 %v53, 2139095040
    %v991 = vshrl.u32 %v990, 23
    %v992 = vsub.s32 %v991, 127
    %v993 = vand.u32 2147483647, %v53
    %v994 = vand.u32 %v993, 8388607
    %v995 = vor.u32 %v994, 8388608
    %v996 = vsub.s32 0, %v995
    %v997 = vadd.s32 %v992, 1
    %vm998 = vcmp.gt.s32.totalorder %v997, 0
    %v999 = vsel %vm998, %v997, 0
    %v1000 = vshrl.u32 %v999, 5
    %v1001 = vand.u32 %v999, 31
    %v1002 = vsub.s32 32, %v1001
    %v1003 = vshrl.u32 683565275, %v1002
    %v1004 = vshll.u32 683565275, %v1001
    %v1005 = vshrl.u32 2475754826, %v1002
    %v1006 = vor.u32 %v1004, %v1005
    %v1007 = vshll.u32 2475754826, %v1001
    %v1008 = vshrl.u32 2131351028, %v1002
    %v1009 = vor.u32 %v1007, %v1008
    %v1010 = vshll.u32 2131351028, %v1001
    %v1011 = vshrl.u32 2102212464, %v1002
    %v1012 = vor.u32 %v1010, %v1011
    %v1013 = vshll.u32 2102212464, %v1001
    %v1014 = vshrl.u32 920167782, %v1002
    %v1015 = vor.u32 %v1013, %v1014
    %v1016 = vshll.u32 920167782, %v1001
    %v1017 = vshrl.u32 1326507024, %v1002
    %v1018 = vor.u32 %v1016, %v1017
    %vm1019 = vcmp.lt.s32.totalorder %v1000, 1
    %vm1020 = vcmp.lt.s32.totalorder %v1000, 2
    %vm1021 = vcmp.lt.s32.totalorder %v1000, 3
    %vm1022 = vcmp.lt.s32.totalorder %v1000, 4
    %v1023 = vsel %vm1019, %v1003, %v1006
    %v1024 = vsel %vm1022, %v1012, 2102212464
    %v1025 = vsel %vm1021, %v1009, %v1024
    %v1026 = vsel %vm1020, %v1023, %v1025
    %v1027 = vsel %vm1019, %v1006, %v1009
    %v1028 = vsel %vm1022, %v1015, 920167782
    %v1029 = vsel %vm1021, %v1012, %v1028
    %v1030 = vsel %vm1020, %v1027, %v1029
    %v1031 = vsel %vm1019, %v1009, %v1012
    %v1032 = vsel %vm1022, %v1018, 1326507024
    %v1033 = vsel %vm1021, %v1015, %v1032
    %v1034 = vsel %vm1020, %v1031, %v1033
    %v1035 = vshll.u32 %v995, 8
    %v1036 = vmul.u32.u64.compose %v1035, %v1034
    %v1037 = vextract.low.u32 %v1036
    %v1038 = vextract.high.u32 %v1036
    %v1039 = vmul.u32.u64.compose %v1035, %v1030
    %v1040 = vextract.low.u32 %v1039
    %v1041 = vextract.high.u32 %v1039
    %v1042 = vmul.u32 %v1035, %v1026
    %v1043 = vadd.s32 %v1038, %v1040
    %vm1044 = vc.u32 %v1038, %v1040
    %v1045 = vadd.s32 %v1041, 1
    %v1046 = vsel %vm1044, %v1045, %v1041
    %v1047 = vadd.s32 %v1042, %v1046
    %v1048 = vadd.s32 %v1047, 536870912
    %v1049 = vshrl.u32 %v1048, 30
    %v1050 = vshll.u32 %v1049, 30
    %v1051 = vsub.s32 %v1047, %v1050
    %vm1052 = vcmp.lt.s32.totalorder %v1051, 0
    %v1053 = vsub.s32 0, %v1051
    %v1054 = vsel %vm1052, %v1053, %v1051
    %v1055 = vclz %v1054
    %v1056 = vsub.s32 %v1055, 2
    %vm1057 = vcmp.gt.s32.totalorder 0, %v1056
    %v1058 = vsel %vm1057, 0, %v1056
    %v1059 = vsub.s32 32, %v1058
    %v1060 = vshll.u32 %v1051, %v1058
    %v1061 = vshrl.u32 %v1043, %v1059
    %v1062 = vor.u32 %v1060, %v1061
    %v1063 = vsub.s32 4294967266, %v1058
    %v1064 = vadd.s32 %v1063, 127
    %v1065 = vshll.u32 %v1064, 23
    %v1066 = vor.u32 4788187, %v1065
    %v1067 = vand.u32 2147483647, %v1066
    %v1069 = vcvt.s32.f32 %v1062
    %v1070 = vmul.f32 %v1069, %v1067
    %v1071 = vxor.u32 %v1070, 2147483648
    %v1072 = vsel %vm989, %v1071, %v1070
    %v1073 = vsub.s32 4, %v1049
    %v1074 = vsel %vm989, %v1073, %v1049
    %v1075 = vsel %vm988, %v53, %v1072
    %v1076 = vsel %vm988, 0, %v1074
    %v1077 = vcosq.f32.pop %v1075
    %v1078 = vsinq.f32.pop %v1075
    %vm1079 = vweird.f32 %v53
    %v1080 = vand.u32 %v1076, 3
    %vm1081 = vcmp.lt.s32.totalorder %v1080, 2
    %vm1082 = vcmp.eq.s32.totalorder %v1080, 0
    %v1083 = vxor.u32 %v1078, 2147483648
    %v1084 = vsel %vm1082, %v1077, %v1083
    %vm1085 = vcmp.eq.s32.totalorder %v1080, 2
    %v1086 = vxor.u32 %v1077, 2147483648
    %v1087 = vsel %vm1085, %v1086, %v1078
    %v1088 = vsel %vm1081, %v1084, %v1087
    %v1089 = vsel %vm1079, nan, %v1088
    %v1090 = vand.u32 2147483647, %v54
    %vm1091 = vcmp.le.f32.partialorder %v1090, 0.7853982
    %vm1092 = vcmp.lt.s32.totalorder %v54, 0
    %v1093 = vand.u32 %v54, 2139095040
    %v1094 = vshrl.u32 %v1093, 23
    %v1095 = vsub.s32 %v1094, 127
    %v1096 = vand.u32 2147483647, %v54
    %v1097 = vand.u32 %v1096, 8388607
    %v1098 = vor.u32 %v1097, 8388608
    %v1099 = vsub.s32 0, %v1098
    %v1100 = vadd.s32 %v1095, 1
    %vm1101 = vcmp.gt.s32.totalorder %v1100, 0
    %v1102 = vsel %vm1101, %v1100, 0
    %v1103 = vshrl.u32 %v1102, 5
    %v1104 = vand.u32 %v1102, 31
    %v1105 = vsub.s32 32, %v1104
    %v1106 = vshrl.u32 683565275, %v1105
    %v1107 = vshll.u32 683565275, %v1104
    %v1108 = vshrl.u32 2475754826, %v1105
    %v1109 = vor.u32 %v1107, %v1108
    %v1110 = vshll.u32 2475754826, %v1104
    %v1111 = vshrl.u32 2131351028, %v1105
    %v1112 = vor.u32 %v1110, %v1111
    %v1113 = vshll.u32 2131351028, %v1104
    %v1114 = vshrl.u32 2102212464, %v1105
    %v1115 = vor.u32 %v1113, %v1114
    %v1116 = vshll.u32 2102212464, %v1104
    %v1117 = vshrl.u32 920167782, %v1105
    %v1118 = vor.u32 %v1116, %v1117
    %v1119 = vshll.u32 920167782, %v1104
    %v1120 = vshrl.u32 1326507024, %v1105
    %v1121 = vor.u32 %v1119, %v1120
    %vm1122 = vcmp.lt.s32.totalorder %v1103, 1
    %vm1123 = vcmp.lt.s32.totalorder %v1103, 2
    %vm1124 = vcmp.lt.s32.totalorder %v1103, 3
    %vm1125 = vcmp.lt.s32.totalorder %v1103, 4
    %v1126 = vsel %vm1122, %v1106, %v1109
    %v1127 = vsel %vm1125, %v1115, 2102212464
    %v1128 = vsel %vm1124, %v1112, %v1127
    %v1129 = vsel %vm1123, %v1126, %v1128
    %v1130 = vsel %vm1122, %v1109, %v1112
    %v1131 = vsel %vm1125, %v1118, 920167782
    %v1132 = vsel %vm1124, %v1115, %v1131
    %v1133 = vsel %vm1123, %v1130, %v1132
    %v1134 = vsel %vm1122, %v1112, %v1115
    %v1135 = vsel %vm1125, %v1121, 1326507024
    %v1136 = vsel %vm1124, %v1118, %v1135
    %v1137 = vsel %vm1123, %v1134, %v1136
    %v1138 = vshll.u32 %v1098, 8
    %v1139 = vmul.u32.u64.compose %v1138, %v1137
    %v1140 = vextract.low.u32 %v1139
    %v1141 = vextract.high.u32 %v1139
    %v1142 = vmul.u32.u64.compose %v1138, %v1133
    %v1143 = vextract.low.u32 %v1142
    %v1144 = vextract.high.u32 %v1142
    %v1145 = vmul.u32 %v1138, %v1129
    %v1146 = vadd.s32 %v1141, %v1143
    %vm1147 = vc.u32 %v1141, %v1143
    %v1148 = vadd.s32 %v1144, 1
    %v1149 = vsel %vm1147, %v1148, %v1144
    %v1150 = vadd.s32 %v1145, %v1149
    %v1151 = vadd.s32 %v1150, 536870912
    %v1152 = vshrl.u32 %v1151, 30
    %v1153 = vshll.u32 %v1152, 30
    %v1154 = vsub.s32 %v1150, %v1153
    %vm1155 = vcmp.lt.s32.totalorder %v1154, 0
    %v1156 = vsub.s32 0, %v1154
    %v1157 = vsel %vm1155, %v1156, %v1154
    %v1158 = vclz %v1157
    %v1159 = vsub.s32 %v1158, 2
    %vm1160 = vcmp.gt.s32.totalorder 0, %v1159
    %v1161 = vsel %vm1160, 0, %v1159
    %v1162 = vsub.s32 32, %v1161
    %v1163 = vshll.u32 %v1154, %v1161
    %v1164 = vshrl.u32 %v1146, %v1162
    %v1165 = vor.u32 %v1163, %v1164
    %v1166 = vsub.s32 4294967266, %v1161
    %v1167 = vadd.s32 %v1166, 127
    %v1168 = vshll.u32 %v1167, 23
    %v1169 = vor.u32 4788187, %v1168
    %v1170 = vand.u32 2147483647, %v1169
    %v1172 = vcvt.s32.f32 %v1165
    %v1173 = vmul.f32 %v1172, %v1170
    %v1174 = vxor.u32 %v1173, 2147483648
    %v1175 = vsel %vm1092, %v1174, %v1173
    %v1176 = vsub.s32 4, %v1152
    %v1177 = vsel %vm1092, %v1176, %v1152
    %v1178 = vsel %vm1091, %v54, %v1175
    %v1179 = vsel %vm1091, 0, %v1177
    %v1180 = vcosq.f32.pop %v1178
    %v1181 = vsinq.f32.pop %v1178
    %vm1182 = vweird.f32 %v54
    %v1183 = vand.u32 %v1179, 3
    %vm1184 = vcmp.lt.s32.totalorder %v1183, 2
    %vm1185 = vcmp.eq.s32.totalorder %v1183, 0
    %v1186 = vxor.u32 %v1181, 2147483648
    %v1187 = vsel %vm1185, %v1180, %v1186
    %vm1188 = vcmp.eq.s32.totalorder %v1183, 2
    %v1189 = vxor.u32 %v1180, 2147483648
    %v1190 = vsel %vm1188, %v1189, %v1181
    %v1191 = vsel %vm1184, %v1187, %v1190
    %v1192 = vsel %vm1182, nan, %v1191
    %v1193 = vand.u32 2147483647, %v55
    %vm1194 = vcmp.le.f32.partialorder %v1193, 0.7853982
    %vm1195 = vcmp.lt.s32.totalorder %v55, 0
    %v1196 = vand.u32 %v55, 2139095040
    %v1197 = vshrl.u32 %v1196, 23
    %v1198 = vsub.s32 %v1197, 127
    %v1199 = vand.u32 2147483647, %v55
    %v1200 = vand.u32 %v1199, 8388607
    %v1201 = vor.u32 %v1200, 8388608
    %v1202 = vsub.s32 0, %v1201
    %v1203 = vadd.s32 %v1198, 1
    %vm1204 = vcmp.gt.s32.totalorder %v1203, 0
    %v1205 = vsel %vm1204, %v1203, 0
    %v1206 = vshrl.u32 %v1205, 5
    %v1207 = vand.u32 %v1205, 31
    %v1208 = vsub.s32 32, %v1207
    %v1209 = vshrl.u32 683565275, %v1208
    %v1210 = vshll.u32 683565275, %v1207
    %v1211 = vshrl.u32 2475754826, %v1208
    %v1212 = vor.u32 %v1210, %v1211
    %v1213 = vshll.u32 2475754826, %v1207
    %v1214 = vshrl.u32 2131351028, %v1208
    %v1215 = vor.u32 %v1213, %v1214
    %v1216 = vshll.u32 2131351028, %v1207
    %v1217 = vshrl.u32 2102212464, %v1208
    %v1218 = vor.u32 %v1216, %v1217
    %v1219 = vshll.u32 2102212464, %v1207
    %v1220 = vshrl.u32 920167782, %v1208
    %v1221 = vor.u32 %v1219, %v1220
    %v1222 = vshll.u32 920167782, %v1207
    %v1223 = vshrl.u32 1326507024, %v1208
    %v1224 = vor.u32 %v1222, %v1223
    %vm1225 = vcmp.lt.s32.totalorder %v1206, 1
    %vm1226 = vcmp.lt.s32.totalorder %v1206, 2
    %vm1227 = vcmp.lt.s32.totalorder %v1206, 3
    %vm1228 = vcmp.lt.s32.totalorder %v1206, 4
    %v1229 = vsel %vm1225, %v1209, %v1212
    %v1230 = vsel %vm1228, %v1218, 2102212464
    %v1231 = vsel %vm1227, %v1215, %v1230
    %v1232 = vsel %vm1226, %v1229, %v1231
    %v1233 = vsel %vm1225, %v1212, %v1215
    %v1234 = vsel %vm1228, %v1221, 920167782
    %v1235 = vsel %vm1227, %v1218, %v1234
    %v1236 = vsel %vm1226, %v1233, %v1235
    %v1237 = vsel %vm1225, %v1215, %v1218
    %v1238 = vsel %vm1228, %v1224, 1326507024
    %v1239 = vsel %vm1227, %v1221, %v1238
    %v1240 = vsel %vm1226, %v1237, %v1239
    %v1241 = vshll.u32 %v1201, 8
    %v1242 = vmul.u32.u64.compose %v1241, %v1240
    %v1243 = vextract.low.u32 %v1242
    %v1244 = vextract.high.u32 %v1242
    %v1245 = vmul.u32.u64.compose %v1241, %v1236
    %v1246 = vextract.low.u32 %v1245
    %v1247 = vextract.high.u32 %v1245
    %v1248 = vmul.u32 %v1241, %v1232
    %v1249 = vadd.s32 %v1244, %v1246
    %vm1250 = vc.u32 %v1244, %v1246
    %v1251 = vadd.s32 %v1247, 1
    %v1252 = vsel %vm1250, %v1251, %v1247
    %v1253 = vadd.s32 %v1248, %v1252
    %v1254 = vadd.s32 %v1253, 536870912
    %v1255 = vshrl.u32 %v1254, 30
    %v1256 = vshll.u32 %v1255, 30
    %v1257 = vsub.s32 %v1253, %v1256
    %vm1258 = vcmp.lt.s32.totalorder %v1257, 0
    %v1259 = vsub.s32 0, %v1257
    %v1260 = vsel %vm1258, %v1259, %v1257
    %v1261 = vclz %v1260
    %v1262 = vsub.s32 %v1261, 2
    %vm1263 = vcmp.gt.s32.totalorder 0, %v1262
    %v1264 = vsel %vm1263, 0, %v1262
    %v1265 = vsub.s32 32, %v1264
    %v1266 = vshll.u32 %v1257, %v1264
    %v1267 = vshrl.u32 %v1249, %v1265
    %v1268 = vor.u32 %v1266, %v1267
    %v1269 = vsub.s32 4294967266, %v1264
    %v1270 = vadd.s32 %v1269, 127
    %v1271 = vshll.u32 %v1270, 23
    %v1272 = vor.u32 4788187, %v1271
    %v1273 = vand.u32 2147483647, %v1272
    %v1275 = vcvt.s32.f32 %v1268
    %v1276 = vmul.f32 %v1275, %v1273
    %v1277 = vxor.u32 %v1276, 2147483648
    %v1278 = vsel %vm1195, %v1277, %v1276
    %v1279 = vsub.s32 4, %v1255
    %v1280 = vsel %vm1195, %v1279, %v1255
    %v1281 = vsel %vm1194, %v55, %v1278
    %v1282 = vsel %vm1194, 0, %v1280
    %v1283 = vcosq.f32.pop %v1281
    %v1284 = vsinq.f32.pop %v1281
    %vm1285 = vweird.f32 %v55
    %v1286 = vand.u32 %v1282, 3
    %vm1287 = vcmp.lt.s32.totalorder %v1286, 2
    %vm1288 = vcmp.eq.s32.totalorder %v1286, 0
    %v1289 = vxor.u32 %v1284, 2147483648
    %v1290 = vsel %vm1288, %v1283, %v1289
    %vm1291 = vcmp.eq.s32.totalorder %v1286, 2
    %v1292 = vxor.u32 %v1283, 2147483648
    %v1293 = vsel %vm1291, %v1292, %v1284
    %v1294 = vsel %vm1287, %v1290, %v1293
    %v1295 = vsel %vm1285, nan, %v1294
    %v1296 = vand.u32 2147483647, %v56
    %vm1297 = vcmp.le.f32.partialorder %v1296, 0.7853982
    %vm1298 = vcmp.lt.s32.totalorder %v56, 0
    %v1299 = vand.u32 %v56, 2139095040
    %v1300 = vshrl.u32 %v1299, 23
    %v1301 = vsub.s32 %v1300, 127
    %v1302 = vand.u32 2147483647, %v56
    %v1303 = vand.u32 %v1302, 8388607
    %v1304 = vor.u32 %v1303, 8388608
    %v1305 = vsub.s32 0, %v1304
    %v1306 = vadd.s32 %v1301, 1
    %vm1307 = vcmp.gt.s32.totalorder %v1306, 0
    %v1308 = vsel %vm1307, %v1306, 0
    %v1309 = vshrl.u32 %v1308, 5
    %v1310 = vand.u32 %v1308, 31
    %v1311 = vsub.s32 32, %v1310
    %v1312 = vshrl.u32 683565275, %v1311
    %v1313 = vshll.u32 683565275, %v1310
    %v1314 = vshrl.u32 2475754826, %v1311
    %v1315 = vor.u32 %v1313, %v1314
    %v1316 = vshll.u32 2475754826, %v1310
    %v1317 = vshrl.u32 2131351028, %v1311
    %v1318 = vor.u32 %v1316, %v1317
    %v1319 = vshll.u32 2131351028, %v1310
    %v1320 = vshrl.u32 2102212464, %v1311
    %v1321 = vor.u32 %v1319, %v1320
    %v1322 = vshll.u32 2102212464, %v1310
    %v1323 = vshrl.u32 920167782, %v1311
    %v1324 = vor.u32 %v1322, %v1323
    %v1325 = vshll.u32 920167782, %v1310
    %v1326 = vshrl.u32 1326507024, %v1311
    %v1327 = vor.u32 %v1325, %v1326
    %vm1328 = vcmp.lt.s32.totalorder %v1309, 1
    %vm1329 = vcmp.lt.s32.totalorder %v1309, 2
    %vm1330 = vcmp.lt.s32.totalorder %v1309, 3
    %vm1331 = vcmp.lt.s32.totalorder %v1309, 4
    %v1332 = vsel %vm1328, %v1312, %v1315
    %v1333 = vsel %vm1331, %v1321, 2102212464
    %v1334 = vsel %vm1330, %v1318, %v1333
    %v1335 = vsel %vm1329, %v1332, %v1334
    %v1336 = vsel %vm1328, %v1315, %v1318
    %v1337 = vsel %vm1331, %v1324, 920167782
    %v1338 = vsel %vm1330, %v1321, %v1337
    %v1339 = vsel %vm1329, %v1336, %v1338
    %v1340 = vsel %vm1328, %v1318, %v1321
    %v1341 = vsel %vm1331, %v1327, 1326507024
    %v1342 = vsel %vm1330, %v1324, %v1341
    %v1343 = vsel %vm1329, %v1340, %v1342
    %v1344 = vshll.u32 %v1304, 8
    %v1345 = vmul.u32.u64.compose %v1344, %v1343
    %v1346 = vextract.low.u32 %v1345
    %v1347 = vextract.high.u32 %v1345
    %v1348 = vmul.u32.u64.compose %v1344, %v1339
    %v1349 = vextract.low.u32 %v1348
    %v1350 = vextract.high.u32 %v1348
    %v1351 = vmul.u32 %v1344, %v1335
    %v1352 = vadd.s32 %v1347, %v1349
    %vm1353 = vc.u32 %v1347, %v1349
    %v1354 = vadd.s32 %v1350, 1
    %v1355 = vsel %vm1353, %v1354, %v1350
    %v1356 = vadd.s32 %v1351, %v1355
    %v1357 = vadd.s32 %v1356, 536870912
    %v1358 = vshrl.u32 %v1357, 30
    %v1359 = vshll.u32 %v1358, 30
    %v1360 = vsub.s32 %v1356, %v1359
    %vm1361 = vcmp.lt.s32.totalorder %v1360, 0
    %v1362 = vsub.s32 0, %v1360
    %v1363 = vsel %vm1361, %v1362, %v1360
    %v1364 = vclz %v1363
    %v1365 = vsub.s32 %v1364, 2
    %vm1366 = vcmp.gt.s32.totalorder 0, %v1365
    %v1367 = vsel %vm1366, 0, %v1365
    %v1368 = vsub.s32 32, %v1367
    %v1369 = vshll.u32 %v1360, %v1367
    %v1370 = vshrl.u32 %v1352, %v1368
    %v1371 = vor.u32 %v1369, %v1370
    %v1372 = vsub.s32 4294967266, %v1367
    %v1373 = vadd.s32 %v1372, 127
    %v1374 = vshll.u32 %v1373, 23
    %v1375 = vor.u32 4788187, %v1374
    %v1376 = vand.u32 2147483647, %v1375
    %v1378 = vcvt.s32.f32 %v1371
    %v1379 = vmul.f32 %v1378, %v1376
    %v1380 = vxor.u32 %v1379, 2147483648
    %v1381 = vsel %vm1298, %v1380, %v1379
    %v1382 = vsub.s32 4, %v1358
    %v1383 = vsel %vm1298, %v1382, %v1358
    %v1384 = vsel %vm1297, %v56, %v1381
    %v1385 = vsel %vm1297, 0, %v1383
    %v1386 = vcosq.f32.pop %v1384
    %v1387 = vsinq.f32.pop %v1384
    %vm1388 = vweird.f32 %v56
    %v1389 = vand.u32 %v1385, 3
    %vm1390 = vcmp.lt.s32.totalorder %v1389, 2
    %vm1391 = vcmp.eq.s32.totalorder %v1389, 0
    %v1392 = vxor.u32 %v1387, 2147483648
    %v1393 = vsel %vm1391, %v1386, %v1392
    %vm1394 = vcmp.eq.s32.totalorder %v1389, 2
    %v1395 = vxor.u32 %v1386, 2147483648
    %v1396 = vsel %vm1394, %v1395, %v1387
    %v1397 = vsel %vm1390, %v1393, %v1396
    %v1398 = vsel %vm1388, nan, %v1397
    %v1399 = vand.u32 2147483647, %v57
    %vm1400 = vcmp.le.f32.partialorder %v1399, 0.7853982
    %vm1401 = vcmp.lt.s32.totalorder %v57, 0
    %v1402 = vand.u32 %v57, 2139095040
    %v1403 = vshrl.u32 %v1402, 23
    %v1404 = vsub.s32 %v1403, 127
    %v1405 = vand.u32 2147483647, %v57
    %v1406 = vand.u32 %v1405, 8388607
    %v1407 = vor.u32 %v1406, 8388608
    %v1408 = vsub.s32 0, %v1407
    %v1409 = vadd.s32 %v1404, 1
    %vm1410 = vcmp.gt.s32.totalorder %v1409, 0
    %v1411 = vsel %vm1410, %v1409, 0
    %v1412 = vshrl.u32 %v1411, 5
    %v1413 = vand.u32 %v1411, 31
    %v1414 = vsub.s32 32, %v1413
    %v1415 = vshrl.u32 683565275, %v1414
    %v1416 = vshll.u32 683565275, %v1413
    %v1417 = vshrl.u32 2475754826, %v1414
    %v1418 = vor.u32 %v1416, %v1417
    %v1419 = vshll.u32 2475754826, %v1413
    %v1420 = vshrl.u32 2131351028, %v1414
    %v1421 = vor.u32 %v1419, %v1420
    %v1422 = vshll.u32 2131351028, %v1413
    %v1423 = vshrl.u32 2102212464, %v1414
    %v1424 = vor.u32 %v1422, %v1423
    %v1425 = vshll.u32 2102212464, %v1413
    %v1426 = vshrl.u32 920167782, %v1414
    %v1427 = vor.u32 %v1425, %v1426
    %v1428 = vshll.u32 920167782, %v1413
    %v1429 = vshrl.u32 1326507024, %v1414
    %v1430 = vor.u32 %v1428, %v1429
    %vm1431 = vcmp.lt.s32.totalorder %v1412, 1
    %vm1432 = vcmp.lt.s32.totalorder %v1412, 2
    %vm1433 = vcmp.lt.s32.totalorder %v1412, 3
    %vm1434 = vcmp.lt.s32.totalorder %v1412, 4
    %v1435 = vsel %vm1431, %v1415, %v1418
    %v1436 = vsel %vm1434, %v1424, 2102212464
    %v1437 = vsel %vm1433, %v1421, %v1436
    %v1438 = vsel %vm1432, %v1435, %v1437
    %v1439 = vsel %vm1431, %v1418, %v1421
    %v1440 = vsel %vm1434, %v1427, 920167782
    %v1441 = vsel %vm1433, %v1424, %v1440
    %v1442 = vsel %vm1432, %v1439, %v1441
    %v1443 = vsel %vm1431, %v1421, %v1424
    %v1444 = vsel %vm1434, %v1430, 1326507024
    %v1445 = vsel %vm1433, %v1427, %v1444
    %v1446 = vsel %vm1432, %v1443, %v1445
    %v1447 = vshll.u32 %v1407, 8
    %v1448 = vmul.u32.u64.compose %v1447, %v1446
    %v1449 = vextract.low.u32 %v1448
    %v1450 = vextract.high.u32 %v1448
    %v1451 = vmul.u32.u64.compose %v1447, %v1442
    %v1452 = vextract.low.u32 %v1451
    %v1453 = vextract.high.u32 %v1451
    %v1454 = vmul.u32 %v1447, %v1438
    %v1455 = vadd.s32 %v1450, %v1452
    %vm1456 = vc.u32 %v1450, %v1452
    %v1457 = vadd.s32 %v1453, 1
    %v1458 = vsel %vm1456, %v1457, %v1453
    %v1459 = vadd.s32 %v1454, %v1458
    %v1460 = vadd.s32 %v1459, 536870912
    %v1461 = vshrl.u32 %v1460, 30
    %v1462 = vshll.u32 %v1461, 30
    %v1463 = vsub.s32 %v1459, %v1462
    %vm1464 = vcmp.lt.s32.totalorder %v1463, 0
    %v1465 = vsub.s32 0, %v1463
    %v1466 = vsel %vm1464, %v1465, %v1463
    %v1467 = vclz %v1466
    %v1468 = vsub.s32 %v1467, 2
    %vm1469 = vcmp.gt.s32.totalorder 0, %v1468
    %v1470 = vsel %vm1469, 0, %v1468
    %v1471 = vsub.s32 32, %v1470
    %v1472 = vshll.u32 %v1463, %v1470
    %v1473 = vshrl.u32 %v1455, %v1471
    %v1474 = vor.u32 %v1472, %v1473
    %v1475 = vsub.s32 4294967266, %v1470
    %v1476 = vadd.s32 %v1475, 127
    %v1477 = vshll.u32 %v1476, 23
    %v1478 = vor.u32 4788187, %v1477
    %v1479 = vand.u32 2147483647, %v1478
    %v1481 = vcvt.s32.f32 %v1474
    %v1482 = vmul.f32 %v1481, %v1479
    %v1483 = vxor.u32 %v1482, 2147483648
    %v1484 = vsel %vm1401, %v1483, %v1482
    %v1485 = vsub.s32 4, %v1461
    %v1486 = vsel %vm1401, %v1485, %v1461
    %v1487 = vsel %vm1400, %v57, %v1484
    %v1488 = vsel %vm1400, 0, %v1486
    %v1489 = vcosq.f32.pop %v1487
    %v1490 = vsinq.f32.pop %v1487
    %vm1491 = vweird.f32 %v57
    %v1492 = vand.u32 %v1488, 3
    %vm1493 = vcmp.lt.s32.totalorder %v1492, 2
    %vm1494 = vcmp.eq.s32.totalorder %v1492, 0
    %v1495 = vxor.u32 %v1490, 2147483648
    %v1496 = vsel %vm1494, %v1489, %v1495
    %vm1497 = vcmp.eq.s32.totalorder %v1492, 2
    %v1498 = vxor.u32 %v1489, 2147483648
    %v1499 = vsel %vm1497, %v1498, %v1490
    %v1500 = vsel %vm1493, %v1496, %v1499
    %v1501 = vsel %vm1491, nan, %v1500
    %v1502 = vand.u32 2147483647, %v58
    %vm1503 = vcmp.le.f32.partialorder %v1502, 0.7853982
    %vm1504 = vcmp.lt.s32.totalorder %v58, 0
    %v1505 = vand.u32 %v58, 2139095040
    %v1506 = vshrl.u32 %v1505, 23
    %v1507 = vsub.s32 %v1506, 127
    %v1508 = vand.u32 2147483647, %v58
    %v1509 = vand.u32 %v1508, 8388607
    %v1510 = vor.u32 %v1509, 8388608
    %v1511 = vsub.s32 0, %v1510
    %v1512 = vadd.s32 %v1507, 1
    %vm1513 = vcmp.gt.s32.totalorder %v1512, 0
    %v1514 = vsel %vm1513, %v1512, 0
    %v1515 = vshrl.u32 %v1514, 5
    %v1516 = vand.u32 %v1514, 31
    %v1517 = vsub.s32 32, %v1516
    %v1518 = vshrl.u32 683565275, %v1517
    %v1519 = vshll.u32 683565275, %v1516
    %v1520 = vshrl.u32 2475754826, %v1517
    %v1521 = vor.u32 %v1519, %v1520
    %v1522 = vshll.u32 2475754826, %v1516
    %v1523 = vshrl.u32 2131351028, %v1517
    %v1524 = vor.u32 %v1522, %v1523
    %v1525 = vshll.u32 2131351028, %v1516
    %v1526 = vshrl.u32 2102212464, %v1517
    %v1527 = vor.u32 %v1525, %v1526
    %v1528 = vshll.u32 2102212464, %v1516
    %v1529 = vshrl.u32 920167782, %v1517
    %v1530 = vor.u32 %v1528, %v1529
    %v1531 = vshll.u32 920167782, %v1516
    %v1532 = vshrl.u32 1326507024, %v1517
    %v1533 = vor.u32 %v1531, %v1532
    %vm1534 = vcmp.lt.s32.totalorder %v1515, 1
    %vm1535 = vcmp.lt.s32.totalorder %v1515, 2
    %vm1536 = vcmp.lt.s32.totalorder %v1515, 3
    %vm1537 = vcmp.lt.s32.totalorder %v1515, 4
    %v1538 = vsel %vm1534, %v1518, %v1521
    %v1539 = vsel %vm1537, %v1527, 2102212464
    %v1540 = vsel %vm1536, %v1524, %v1539
    %v1541 = vsel %vm1535, %v1538, %v1540
    %v1542 = vsel %vm1534, %v1521, %v1524
    %v1543 = vsel %vm1537, %v1530, 920167782
    %v1544 = vsel %vm1536, %v1527, %v1543
    %v1545 = vsel %vm1535, %v1542, %v1544
    %v1546 = vsel %vm1534, %v1524, %v1527
    %v1547 = vsel %vm1537, %v1533, 1326507024
    %v1548 = vsel %vm1536, %v1530, %v1547
    %v1549 = vsel %vm1535, %v1546, %v1548
    %v1550 = vshll.u32 %v1510, 8
    %v1551 = vmul.u32.u64.compose %v1550, %v1549
    %v1552 = vextract.low.u32 %v1551
    %v1553 = vextract.high.u32 %v1551
    %v1554 = vmul.u32.u64.compose %v1550, %v1545
    %v1555 = vextract.low.u32 %v1554
    %v1556 = vextract.high.u32 %v1554
    %v1557 = vmul.u32 %v1550, %v1541
    %v1558 = vadd.s32 %v1553, %v1555
    %vm1559 = vc.u32 %v1553, %v1555
    %v1560 = vadd.s32 %v1556, 1
    %v1561 = vsel %vm1559, %v1560, %v1556
    %v1562 = vadd.s32 %v1557, %v1561
    %v1563 = vadd.s32 %v1562, 536870912
    %v1564 = vshrl.u32 %v1563, 30
    %v1565 = vshll.u32 %v1564, 30
    %v1566 = vsub.s32 %v1562, %v1565
    %vm1567 = vcmp.lt.s32.totalorder %v1566, 0
    %v1568 = vsub.s32 0, %v1566
    %v1569 = vsel %vm1567, %v1568, %v1566
    %v1570 = vclz %v1569
    %v1571 = vsub.s32 %v1570, 2
    %vm1572 = vcmp.gt.s32.totalorder 0, %v1571
    %v1573 = vsel %vm1572, 0, %v1571
    %v1574 = vsub.s32 32, %v1573
    %v1575 = vshll.u32 %v1566, %v1573
    %v1576 = vshrl.u32 %v1558, %v1574
    %v1577 = vor.u32 %v1575, %v1576
    %v1578 = vsub.s32 4294967266, %v1573
    %v1579 = vadd.s32 %v1578, 127
    %v1580 = vshll.u32 %v1579, 23
    %v1581 = vor.u32 4788187, %v1580
    %v1582 = vand.u32 2147483647, %v1581
    %v1584 = vcvt.s32.f32 %v1577
    %v1585 = vmul.f32 %v1584, %v1582
    %v1586 = vxor.u32 %v1585, 2147483648
    %v1587 = vsel %vm1504, %v1586, %v1585
    %v1588 = vsub.s32 4, %v1564
    %v1589 = vsel %vm1504, %v1588, %v1564
    %v1590 = vsel %vm1503, %v58, %v1587
    %v1591 = vsel %vm1503, 0, %v1589
    %v1592 = vcosq.f32.pop %v1590
    %v1593 = vsinq.f32.pop %v1590
    %vm1594 = vweird.f32 %v58
    %v1595 = vand.u32 %v1591, 3
    %vm1596 = vcmp.lt.s32.totalorder %v1595, 2
    %vm1597 = vcmp.eq.s32.totalorder %v1595, 0
    %v1598 = vxor.u32 %v1593, 2147483648
    %v1599 = vsel %vm1597, %v1592, %v1598
    %vm1600 = vcmp.eq.s32.totalorder %v1595, 2
    %v1601 = vxor.u32 %v1592, 2147483648
    %v1602 = vsel %vm1600, %v1601, %v1593
    %v1603 = vsel %vm1596, %v1599, %v1602
    %v1604 = vsel %vm1594, nan, %v1603
    %v1605 = vand.u32 2147483647, %v59
    %vm1606 = vcmp.le.f32.partialorder %v1605, 0.7853982
    %vm1607 = vcmp.lt.s32.totalorder %v59, 0
    %v1608 = vand.u32 %v59, 2139095040
    %v1609 = vshrl.u32 %v1608, 23
    %v1610 = vsub.s32 %v1609, 127
    %v1611 = vand.u32 2147483647, %v59
    %v1612 = vand.u32 %v1611, 8388607
    %v1613 = vor.u32 %v1612, 8388608
    %v1614 = vsub.s32 0, %v1613
    %v1615 = vadd.s32 %v1610, 1
    %vm1616 = vcmp.gt.s32.totalorder %v1615, 0
    %v1617 = vsel %vm1616, %v1615, 0
    %v1618 = vshrl.u32 %v1617, 5
    %v1619 = vand.u32 %v1617, 31
    %v1620 = vsub.s32 32, %v1619
    %v1621 = vshrl.u32 683565275, %v1620
    %v1622 = vshll.u32 683565275, %v1619
    %v1623 = vshrl.u32 2475754826, %v1620
    %v1624 = vor.u32 %v1622, %v1623
    %v1625 = vshll.u32 2475754826, %v1619
    %v1626 = vshrl.u32 2131351028, %v1620
    %v1627 = vor.u32 %v1625, %v1626
    %v1628 = vshll.u32 2131351028, %v1619
    %v1629 = vshrl.u32 2102212464, %v1620
    %v1630 = vor.u32 %v1628, %v1629
    %v1631 = vshll.u32 2102212464, %v1619
    %v1632 = vshrl.u32 920167782, %v1620
    %v1633 = vor.u32 %v1631, %v1632
    %v1634 = vshll.u32 920167782, %v1619
    %v1635 = vshrl.u32 1326507024, %v1620
    %v1636 = vor.u32 %v1634, %v1635
    %vm1637 = vcmp.lt.s32.totalorder %v1618, 1
    %vm1638 = vcmp.lt.s32.totalorder %v1618, 2
    %vm1639 = vcmp.lt.s32.totalorder %v1618, 3
    %vm1640 = vcmp.lt.s32.totalorder %v1618, 4
    %v1641 = vsel %vm1637, %v1621, %v1624
    %v1642 = vsel %vm1640, %v1630, 2102212464
    %v1643 = vsel %vm1639, %v1627, %v1642
    %v1644 = vsel %vm1638, %v1641, %v1643
    %v1645 = vsel %vm1637, %v1624, %v1627
    %v1646 = vsel %vm1640, %v1633, 920167782
    %v1647 = vsel %vm1639, %v1630, %v1646
    %v1648 = vsel %vm1638, %v1645, %v1647
    %v1649 = vsel %vm1637, %v1627, %v1630
    %v1650 = vsel %vm1640, %v1636, 1326507024
    %v1651 = vsel %vm1639, %v1633, %v1650
    %v1652 = vsel %vm1638, %v1649, %v1651
    %v1653 = vshll.u32 %v1613, 8
    %v1654 = vmul.u32.u64.compose %v1653, %v1652
    %v1655 = vextract.low.u32 %v1654
    %v1656 = vextract.high.u32 %v1654
    %v1657 = vmul.u32.u64.compose %v1653, %v1648
    %v1658 = vextract.low.u32 %v1657
    %v1659 = vextract.high.u32 %v1657
    %v1660 = vmul.u32 %v1653, %v1644
    %v1661 = vadd.s32 %v1656, %v1658
    %vm1662 = vc.u32 %v1656, %v1658
    %v1663 = vadd.s32 %v1659, 1
    %v1664 = vsel %vm1662, %v1663, %v1659
    %v1665 = vadd.s32 %v1660, %v1664
    %v1666 = vadd.s32 %v1665, 536870912
    %v1667 = vshrl.u32 %v1666, 30
    %v1668 = vshll.u32 %v1667, 30
    %v1669 = vsub.s32 %v1665, %v1668
    %vm1670 = vcmp.lt.s32.totalorder %v1669, 0
    %v1671 = vsub.s32 0, %v1669
    %v1672 = vsel %vm1670, %v1671, %v1669
    %v1673 = vclz %v1672
    %v1674 = vsub.s32 %v1673, 2
    %vm1675 = vcmp.gt.s32.totalorder 0, %v1674
    %v1676 = vsel %vm1675, 0, %v1674
    %v1677 = vsub.s32 32, %v1676
    %v1678 = vshll.u32 %v1669, %v1676
    %v1679 = vshrl.u32 %v1661, %v1677
    %v1680 = vor.u32 %v1678, %v1679
    %v1681 = vsub.s32 4294967266, %v1676
    %v1682 = vadd.s32 %v1681, 127
    %v1683 = vshll.u32 %v1682, 23
    %v1684 = vor.u32 4788187, %v1683
    %v1685 = vand.u32 2147483647, %v1684
    %v1687 = vcvt.s32.f32 %v1680
    %v1688 = vmul.f32 %v1687, %v1685
    %v1689 = vxor.u32 %v1688, 2147483648
    %v1690 = vsel %vm1607, %v1689, %v1688
    %v1691 = vsub.s32 4, %v1667
    %v1692 = vsel %vm1607, %v1691, %v1667
    %v1693 = vsel %vm1606, %v59, %v1690
    %v1694 = vsel %vm1606, 0, %v1692
    %v1695 = vcosq.f32.pop %v1693
    %v1696 = vsinq.f32.pop %v1693
    %vm1697 = vweird.f32 %v59
    %v1698 = vand.u32 %v1694, 3
    %vm1699 = vcmp.lt.s32.totalorder %v1698, 2
    %vm1700 = vcmp.eq.s32.totalorder %v1698, 0
    %v1701 = vxor.u32 %v1696, 2147483648
    %v1702 = vsel %vm1700, %v1695, %v1701
    %vm1703 = vcmp.eq.s32.totalorder %v1698, 2
    %v1704 = vxor.u32 %v1695, 2147483648
    %v1705 = vsel %vm1703, %v1704, %v1696
    %v1706 = vsel %vm1699, %v1702, %v1705
    %v1707 = vsel %vm1697, nan, %v1706
    %v1708 = vld [vmem:[%s2] sm:$0xff]
    %v1709 = vsub.f32 %v162, 1.0
    %v1710 = vsub.f32 %v265, 1.0
    %v1711 = vsub.f32 %v368, 1.0
    %v1712 = vsub.f32 %v471, 1.0
    %v1713 = vsub.f32 %v574, 1.0
    %v1714 = vsub.f32 %v677, 1.0
    %v1715 = vsub.f32 %v780, 1.0
    %v1716 = vsub.f32 %v883, 1.0
    %v1717 = vsub.f32 %v986, 1.0
    %v1718 = vsub.f32 %v1089, 1.0
    %v1719 = vsub.f32 %v1192, 1.0
    %v1720 = vsub.f32 %v1295, 1.0
    %v1721 = vsub.f32 %v1398, 1.0
    %v1722 = vsub.f32 %v1501, 1.0
    %v1723 = vsub.f32 %v1604, 1.0
    %v1724 = vsub.f32 %v1707, 1.0
    %v1725 = vlaneseq
    %v1726 = vshrl.u32 %v1725, 7
    %v1727 = vsub.s32 0, %v1726
    %v1728 = vrot.slane %v1708, %v1727
    %1730 = vset.pattern.permute.xlu0 0
    %1731 = vperm.xlu0 %1730, %v1709
    %v1732 = vpop.permute.xlu0 %1731
    %1735 = vset.pattern.permute.xlu0 0
    %1736 = vperm.xlu0 %1735, %v1710
    %v1737 = vpop.permute.xlu0 %1736
    %1740 = vset.pattern.permute.xlu0 0
    %1741 = vperm.xlu0 %1740, %v1711
    %v1742 = vpop.permute.xlu0 %1741
    %1745 = vset.pattern.permute.xlu0 0
    %1746 = vperm.xlu0 %1745, %v1712
    %v1747 = vpop.permute.xlu0 %1746
    %1750 = vset.pattern.permute.xlu0 0
    %1751 = vperm.xlu0 %1750, %v1713
    %v1752 = vpop.permute.xlu0 %1751
    %1755 = vset.pattern.permute.xlu0 0
    %1756 = vperm.xlu0 %1755, %v1714
    %v1757 = vpop.permute.xlu0 %1756
    %1760 = vset.pattern.permute.xlu0 0
    %1761 = vperm.xlu0 %1760, %v1715
    %v1762 = vpop.permute.xlu0 %1761
    %1765 = vset.pattern.permute.xlu0 0
    %1766 = vperm.xlu0 %1765, %v1716
    %v1767 = vpop.permute.xlu0 %1766
    %1770 = vset.pattern.permute.xlu0 0
    %1771 = vperm.xlu0 %1770, %v1717
    %v1772 = vpop.permute.xlu0 %1771
    %1775 = vset.pattern.permute.xlu0 0
    %1776 = vperm.xlu0 %1775, %v1718
    %v1777 = vpop.permute.xlu0 %1776
    %1780 = vset.pattern.permute.xlu0 0
    %1781 = vperm.xlu0 %1780, %v1719
    %v1782 = vpop.permute.xlu0 %1781
    %1785 = vset.pattern.permute.xlu0 0
    %1786 = vperm.xlu0 %1785, %v1720
    %v1787 = vpop.permute.xlu0 %1786
    %1790 = vset.pattern.permute.xlu0 0
    %1791 = vperm.xlu0 %1790, %v1721
    %v1792 = vpop.permute.xlu0 %1791
    %1795 = vset.pattern.permute.xlu0 0
    %1796 = vperm.xlu0 %1795, %v1722
    %v1797 = vpop.permute.xlu0 %1796
    %1800 = vset.pattern.permute.xlu0 0
    %1801 = vperm.xlu0 %1800, %v1723
    %v1802 = vpop.permute.xlu0 %1801
    %1805 = vset.pattern.permute.xlu0 0
    %1806 = vperm.xlu0 %1805, %v1724
    %v1807 = vpop.permute.xlu0 %1806
    %v1809 = vmul.f32 %v1728, %v1732
    %v1810 = vmul.f32 %v1728, %v1737
    %v1811 = vmul.f32 %v1728, %v1742
    %v1812 = vmul.f32 %v1728, %v1747
    %v1813 = vmul.f32 %v1728, %v1752
    %v1814 = vmul.f32 %v1728, %v1757
    %v1815 = vmul.f32 %v1728, %v1762
    %v1816 = vmul.f32 %v1728, %v1767
    %v1817 = vmul.f32 %v1728, %v1772
    %v1818 = vmul.f32 %v1728, %v1777
    %v1819 = vmul.f32 %v1728, %v1782
    %v1820 = vmul.f32 %v1728, %v1787
    %v1821 = vmul.f32 %v1728, %v1792
    %v1822 = vmul.f32 %v1728, %v1797
    %v1823 = vmul.f32 %v1728, %v1802
    %v1824 = vmul.f32 %v1728, %v1807
    %v1825 = vadd.f32 %v1809, 1.0
    %v1826 = vadd.f32 %v1810, 1.0
    %v1827 = vadd.f32 %v1811, 1.0
    %v1828 = vadd.f32 %v1812, 1.0
    %v1829 = vadd.f32 %v1813, 1.0
    %v1830 = vadd.f32 %v1814, 1.0
    %v1831 = vadd.f32 %v1815, 1.0
    %v1832 = vadd.f32 %v1816, 1.0
    %v1833 = vadd.f32 %v1817, 1.0
    %v1834 = vadd.f32 %v1818, 1.0
    %v1835 = vadd.f32 %v1819, 1.0
    %v1836 = vadd.f32 %v1820, 1.0
    %v1837 = vadd.f32 %v1821, 1.0
    %v1838 = vadd.f32 %v1822, 1.0
    %v1839 = vadd.f32 %v1823, 1.0
    %v1840 = vadd.f32 %v1824, 1.0
    %v1841 = vlaneseq
    %v1842 = vshrl.u32 %v1841, 7
    %v1843 = vsub.s32 1, %v1842
    %v1844 = vrot.slane %v1708, %v1843
    %1845 = vset.pattern.permute.xlu0 1
    %1846 = vperm.xlu0 %1845, %v1709
    %v1847 = vpop.permute.xlu0 %1846
    %1849 = vset.pattern.permute.xlu0 1
    %1850 = vperm.xlu0 %1849, %v1710
    %v1851 = vpop.permute.xlu0 %1850
    %1853 = vset.pattern.permute.xlu0 1
    %1854 = vperm.xlu0 %1853, %v1711
    %v1855 = vpop.permute.xlu0 %1854
    %1857 = vset.pattern.permute.xlu0 1
    %1858 = vperm.xlu0 %1857, %v1712
    %v1859 = vpop.permute.xlu0 %1858
    %1861 = vset.pattern.permute.xlu0 1
    %1862 = vperm.xlu0 %1861, %v1713
    %v1863 = vpop.permute.xlu0 %1862
    %1865 = vset.pattern.permute.xlu0 1
    %1866 = vperm.xlu0 %1865, %v1714
    %v1867 = vpop.permute.xlu0 %1866
    %1869 = vset.pattern.permute.xlu0 1
    %1870 = vperm.xlu0 %1869, %v1715
    %v1871 = vpop.permute.xlu0 %1870
    %1873 = vset.pattern.permute.xlu0 1
    %1874 = vperm.xlu0 %1873, %v1716
    %v1875 = vpop.permute.xlu0 %1874
    %1877 = vset.pattern.permute.xlu0 1
    %1878 = vperm.xlu0 %1877, %v1717
    %v1879 = vpop.permute.xlu0 %1878
    %1881 = vset.pattern.permute.xlu0 1
    %1882 = vperm.xlu0 %1881, %v1718
    %v1883 = vpop.permute.xlu0 %1882
    %1885 = vset.pattern.permute.xlu0 1
    %1886 = vperm.xlu0 %1885, %v1719
    %v1887 = vpop.permute.xlu0 %1886
    %1889 = vset.pattern.permute.xlu0 1
    %1890 = vperm.xlu0 %1889, %v1720
    %v1891 = vpop.permute.xlu0 %1890
    %1893 = vset.pattern.permute.xlu0 1
    %1894 = vperm.xlu0 %1893, %v1721
    %v1895 = vpop.permute.xlu0 %1894
    %1897 = vset.pattern.permute.xlu0 1
    %1898 = vperm.xlu0 %1897, %v1722
    %v1899 = vpop.permute.xlu0 %1898
    %1901 = vset.pattern.permute.xlu0 1
    %1902 = vperm.xlu0 %1901, %v1723
    %v1903 = vpop.permute.xlu0 %1902
    %1905 = vset.pattern.permute.xlu0 1
    %1906 = vperm.xlu0 %1905, %v1724
    %v1907 = vpop.permute.xlu0 %1906
    %v1909 = vmul.f32 %v1844, %v1847
    %v1910 = vmul.f32 %v1844, %v1851
    %v1911 = vmul.f32 %v1844, %v1855
    %v1912 = vmul.f32 %v1844, %v1859
    %v1913 = vmul.f32 %v1844, %v1863
    %v1914 = vmul.f32 %v1844, %v1867
    %v1915 = vmul.f32 %v1844, %v1871
    %v1916 = vmul.f32 %v1844, %v1875
    %v1917 = vmul.f32 %v1844, %v1879
    %v1918 = vmul.f32 %v1844, %v1883
    %v1919 = vmul.f32 %v1844, %v1887
    %v1920 = vmul.f32 %v1844, %v1891
    %v1921 = vmul.f32 %v1844, %v1895
    %v1922 = vmul.f32 %v1844, %v1899
    %v1923 = vmul.f32 %v1844, %v1903
    %v1924 = vmul.f32 %v1844, %v1907
    %v1925 = vadd.f32 %v1909, 1.0
    %v1926 = vadd.f32 %v1910, 1.0
    %v1927 = vadd.f32 %v1911, 1.0
    %v1928 = vadd.f32 %v1912, 1.0
    %v1929 = vadd.f32 %v1913, 1.0
    %v1930 = vadd.f32 %v1914, 1.0
    %v1931 = vadd.f32 %v1915, 1.0
    %v1932 = vadd.f32 %v1916, 1.0
    %v1933 = vadd.f32 %v1917, 1.0
    %v1934 = vadd.f32 %v1918, 1.0
    %v1935 = vadd.f32 %v1919, 1.0
    %v1936 = vadd.f32 %v1920, 1.0
    %v1937 = vadd.f32 %v1921, 1.0
    %v1938 = vadd.f32 %v1922, 1.0
    %v1939 = vadd.f32 %v1923, 1.0
    %v1940 = vadd.f32 %v1924, 1.0
    %v1941 = vmul.f32 %v1825, %v1925
    %v1942 = vmul.f32 %v1826, %v1926
    %v1943 = vmul.f32 %v1827, %v1927
    %v1944 = vmul.f32 %v1828, %v1928
    %v1945 = vmul.f32 %v1829, %v1929
    %v1946 = vmul.f32 %v1830, %v1930
    %v1947 = vmul.f32 %v1831, %v1931
    %v1948 = vmul.f32 %v1832, %v1932
    %v1949 = vmul.f32 %v1833, %v1933
    %v1950 = vmul.f32 %v1834, %v1934
    %v1951 = vmul.f32 %v1835, %v1935
    %v1952 = vmul.f32 %v1836, %v1936
    %v1953 = vmul.f32 %v1837, %v1937
    %v1954 = vmul.f32 %v1838, %v1938
    %v1955 = vmul.f32 %v1839, %v1939
    %v1956 = vmul.f32 %v1840, %v1940
    %v1957 = vlaneseq
    %v1958 = vshrl.u32 %v1957, 7
    %v1959 = vsub.s32 2, %v1958
    %v1960 = vrot.slane %v1708, %v1959
    %1961 = vset.pattern.permute.xlu0 2
    %1962 = vperm.xlu0 %1961, %v1709
    %v1963 = vpop.permute.xlu0 %1962
    %1965 = vset.pattern.permute.xlu0 2
    %1966 = vperm.xlu0 %1965, %v1710
    %v1967 = vpop.permute.xlu0 %1966
    %1969 = vset.pattern.permute.xlu0 2
    %1970 = vperm.xlu0 %1969, %v1711
    %v1971 = vpop.permute.xlu0 %1970
    %1973 = vset.pattern.permute.xlu0 2
    %1974 = vperm.xlu0 %1973, %v1712
    %v1975 = vpop.permute.xlu0 %1974
    %1977 = vset.pattern.permute.xlu0 2
    %1978 = vperm.xlu0 %1977, %v1713
    %v1979 = vpop.permute.xlu0 %1978
    %1981 = vset.pattern.permute.xlu0 2
    %1982 = vperm.xlu0 %1981, %v1714
    %v1983 = vpop.permute.xlu0 %1982
    %1985 = vset.pattern.permute.xlu0 2
    %1986 = vperm.xlu0 %1985, %v1715
    %v1987 = vpop.permute.xlu0 %1986
    %1989 = vset.pattern.permute.xlu0 2
    %1990 = vperm.xlu0 %1989, %v1716
    %v1991 = vpop.permute.xlu0 %1990
    %1993 = vset.pattern.permute.xlu0 2
    %1994 = vperm.xlu0 %1993, %v1717
    %v1995 = vpop.permute.xlu0 %1994
    %1997 = vset.pattern.permute.xlu0 2
    %1998 = vperm.xlu0 %1997, %v1718
    %v1999 = vpop.permute.xlu0 %1998
    %2001 = vset.pattern.permute.xlu0 2
    %2002 = vperm.xlu0 %2001, %v1719
    %v2003 = vpop.permute.xlu0 %2002
    %2005 = vset.pattern.permute.xlu0 2
    %2006 = vperm.xlu0 %2005, %v1720
    %v2007 = vpop.permute.xlu0 %2006
    %2009 = vset.pattern.permute.xlu0 2
    %2010 = vperm.xlu0 %2009, %v1721
    %v2011 = vpop.permute.xlu0 %2010
    %2013 = vset.pattern.permute.xlu0 2
    %2014 = vperm.xlu0 %2013, %v1722
    %v2015 = vpop.permute.xlu0 %2014
    %2017 = vset.pattern.permute.xlu0 2
    %2018 = vperm.xlu0 %2017, %v1723
    %v2019 = vpop.permute.xlu0 %2018
    %2021 = vset.pattern.permute.xlu0 2
    %2022 = vperm.xlu0 %2021, %v1724
    %v2023 = vpop.permute.xlu0 %2022
    %v2025 = vmul.f32 %v1960, %v1963
    %v2026 = vmul.f32 %v1960, %v1967
    %v2027 = vmul.f32 %v1960, %v1971
    %v2028 = vmul.f32 %v1960, %v1975
    %v2029 = vmul.f32 %v1960, %v1979
    %v2030 = vmul.f32 %v1960, %v1983
    %v2031 = vmul.f32 %v1960, %v1987
    %v2032 = vmul.f32 %v1960, %v1991
    %v2033 = vmul.f32 %v1960, %v1995
    %v2034 = vmul.f32 %v1960, %v1999
    %v2035 = vmul.f32 %v1960, %v2003
    %v2036 = vmul.f32 %v1960, %v2007
    %v2037 = vmul.f32 %v1960, %v2011
    %v2038 = vmul.f32 %v1960, %v2015
    %v2039 = vmul.f32 %v1960, %v2019
    %v2040 = vmul.f32 %v1960, %v2023
    %v2041 = vadd.f32 %v2025, 1.0
    %v2042 = vadd.f32 %v2026, 1.0
    %v2043 = vadd.f32 %v2027, 1.0
    %v2044 = vadd.f32 %v2028, 1.0
    %v2045 = vadd.f32 %v2029, 1.0
    %v2046 = vadd.f32 %v2030, 1.0
    %v2047 = vadd.f32 %v2031, 1.0
    %v2048 = vadd.f32 %v2032, 1.0
    %v2049 = vadd.f32 %v2033, 1.0
    %v2050 = vadd.f32 %v2034, 1.0
    %v2051 = vadd.f32 %v2035, 1.0
    %v2052 = vadd.f32 %v2036, 1.0
    %v2053 = vadd.f32 %v2037, 1.0
    %v2054 = vadd.f32 %v2038, 1.0
    %v2055 = vadd.f32 %v2039, 1.0
    %v2056 = vadd.f32 %v2040, 1.0
    %v2057 = vmul.f32 %v1941, %v2041
    %v2058 = vmul.f32 %v1942, %v2042
    %v2059 = vmul.f32 %v1943, %v2043
    %v2060 = vmul.f32 %v1944, %v2044
    %v2061 = vmul.f32 %v1945, %v2045
    %v2062 = vmul.f32 %v1946, %v2046
    %v2063 = vmul.f32 %v1947, %v2047
    %v2064 = vmul.f32 %v1948, %v2048
    %v2065 = vmul.f32 %v1949, %v2049
    %v2066 = vmul.f32 %v1950, %v2050
    %v2067 = vmul.f32 %v1951, %v2051
    %v2068 = vmul.f32 %v1952, %v2052
    %v2069 = vmul.f32 %v1953, %v2053
    %v2070 = vmul.f32 %v1954, %v2054
    %v2071 = vmul.f32 %v1955, %v2055
    %v2072 = vmul.f32 %v1956, %v2056
    %v2073 = vlaneseq
    %v2074 = vshrl.u32 %v2073, 7
    %v2075 = vsub.s32 3, %v2074
    %v2076 = vrot.slane %v1708, %v2075
    %2077 = vset.pattern.permute.xlu0 3
    %2078 = vperm.xlu0 %2077, %v1709
    %v2079 = vpop.permute.xlu0 %2078
    %2081 = vset.pattern.permute.xlu0 3
    %2082 = vperm.xlu0 %2081, %v1710
    %v2083 = vpop.permute.xlu0 %2082
    %2085 = vset.pattern.permute.xlu0 3
    %2086 = vperm.xlu0 %2085, %v1711
    %v2087 = vpop.permute.xlu0 %2086
    %2089 = vset.pattern.permute.xlu0 3
    %2090 = vperm.xlu0 %2089, %v1712
    %v2091 = vpop.permute.xlu0 %2090
    %2093 = vset.pattern.permute.xlu0 3
    %2094 = vperm.xlu0 %2093, %v1713
    %v2095 = vpop.permute.xlu0 %2094
    %2097 = vset.pattern.permute.xlu0 3
    %2098 = vperm.xlu0 %2097, %v1714
    %v2099 = vpop.permute.xlu0 %2098
    %2101 = vset.pattern.permute.xlu0 3
    %2102 = vperm.xlu0 %2101, %v1715
    %v2103 = vpop.permute.xlu0 %2102
    %2105 = vset.pattern.permute.xlu0 3
    %2106 = vperm.xlu0 %2105, %v1716
    %v2107 = vpop.permute.xlu0 %2106
    %2109 = vset.pattern.permute.xlu0 3
    %2110 = vperm.xlu0 %2109, %v1717
    %v2111 = vpop.permute.xlu0 %2110
    %2113 = vset.pattern.permute.xlu0 3
    %2114 = vperm.xlu0 %2113, %v1718
    %v2115 = vpop.permute.xlu0 %2114
    %2117 = vset.pattern.permute.xlu0 3
    %2118 = vperm.xlu0 %2117, %v1719
    %v2119 = vpop.permute.xlu0 %2118
    %2121 = vset.pattern.permute.xlu0 3
    %2122 = vperm.xlu0 %2121, %v1720
    %v2123 = vpop.permute.xlu0 %2122
    %2125 = vset.pattern.permute.xlu0 3
    %2126 = vperm.xlu0 %2125, %v1721
    %v2127 = vpop.permute.xlu0 %2126
    %2129 = vset.pattern.permute.xlu0 3
    %2130 = vperm.xlu0 %2129, %v1722
    %v2131 = vpop.permute.xlu0 %2130
    %2133 = vset.pattern.permute.xlu0 3
    %2134 = vperm.xlu0 %2133, %v1723
    %v2135 = vpop.permute.xlu0 %2134
    %2137 = vset.pattern.permute.xlu0 3
    %2138 = vperm.xlu0 %2137, %v1724
    %v2139 = vpop.permute.xlu0 %2138
    %v2141 = vmul.f32 %v2076, %v2079
    %v2142 = vmul.f32 %v2076, %v2083
    %v2143 = vmul.f32 %v2076, %v2087
    %v2144 = vmul.f32 %v2076, %v2091
    %v2145 = vmul.f32 %v2076, %v2095
    %v2146 = vmul.f32 %v2076, %v2099
    %v2147 = vmul.f32 %v2076, %v2103
    %v2148 = vmul.f32 %v2076, %v2107
    %v2149 = vmul.f32 %v2076, %v2111
    %v2150 = vmul.f32 %v2076, %v2115
    %v2151 = vmul.f32 %v2076, %v2119
    %v2152 = vmul.f32 %v2076, %v2123
    %v2153 = vmul.f32 %v2076, %v2127
    %v2154 = vmul.f32 %v2076, %v2131
    %v2155 = vmul.f32 %v2076, %v2135
    %v2156 = vmul.f32 %v2076, %v2139
    %v2157 = vadd.f32 %v2141, 1.0
    %v2158 = vadd.f32 %v2142, 1.0
    %v2159 = vadd.f32 %v2143, 1.0
    %v2160 = vadd.f32 %v2144, 1.0
    %v2161 = vadd.f32 %v2145, 1.0
    %v2162 = vadd.f32 %v2146, 1.0
    %v2163 = vadd.f32 %v2147, 1.0
    %v2164 = vadd.f32 %v2148, 1.0
    %v2165 = vadd.f32 %v2149, 1.0
    %v2166 = vadd.f32 %v2150, 1.0
    %v2167 = vadd.f32 %v2151, 1.0
    %v2168 = vadd.f32 %v2152, 1.0
    %v2169 = vadd.f32 %v2153, 1.0
    %v2170 = vadd.f32 %v2154, 1.0
    %v2171 = vadd.f32 %v2155, 1.0
    %v2172 = vadd.f32 %v2156, 1.0
    %v2173 = vmul.f32 %v2057, %v2157
    %v2174 = vmul.f32 %v2058, %v2158
    %v2175 = vmul.f32 %v2059, %v2159
    %v2176 = vmul.f32 %v2060, %v2160
    %v2177 = vmul.f32 %v2061, %v2161
    %v2178 = vmul.f32 %v2062, %v2162
    %v2179 = vmul.f32 %v2063, %v2163
    %v2180 = vmul.f32 %v2064, %v2164
    %v2181 = vmul.f32 %v2065, %v2165
    %v2182 = vmul.f32 %v2066, %v2166
    %v2183 = vmul.f32 %v2067, %v2167
    %v2184 = vmul.f32 %v2068, %v2168
    %v2185 = vmul.f32 %v2069, %v2169
    %v2186 = vmul.f32 %v2070, %v2170
    %v2187 = vmul.f32 %v2071, %v2171
    %v2188 = vmul.f32 %v2072, %v2172
    %v2189 = vlaneseq
    %v2190 = vshrl.u32 %v2189, 7
    %v2191 = vsub.s32 4, %v2190
    %v2192 = vrot.slane %v1708, %v2191
    %2193 = vset.pattern.permute.xlu0 4
    %2194 = vperm.xlu0 %2193, %v1709
    %v2195 = vpop.permute.xlu0 %2194
    %2197 = vset.pattern.permute.xlu0 4
    %2198 = vperm.xlu0 %2197, %v1710
    %v2199 = vpop.permute.xlu0 %2198
    %2201 = vset.pattern.permute.xlu0 4
    %2202 = vperm.xlu0 %2201, %v1711
    %v2203 = vpop.permute.xlu0 %2202
    %2205 = vset.pattern.permute.xlu0 4
    %2206 = vperm.xlu0 %2205, %v1712
    %v2207 = vpop.permute.xlu0 %2206
    %2209 = vset.pattern.permute.xlu0 4
    %2210 = vperm.xlu0 %2209, %v1713
    %v2211 = vpop.permute.xlu0 %2210
    %2213 = vset.pattern.permute.xlu0 4
    %2214 = vperm.xlu0 %2213, %v1714
    %v2215 = vpop.permute.xlu0 %2214
    %2217 = vset.pattern.permute.xlu0 4
    %2218 = vperm.xlu0 %2217, %v1715
    %v2219 = vpop.permute.xlu0 %2218
    %2221 = vset.pattern.permute.xlu0 4
    %2222 = vperm.xlu0 %2221, %v1716
    %v2223 = vpop.permute.xlu0 %2222
    %2225 = vset.pattern.permute.xlu0 4
    %2226 = vperm.xlu0 %2225, %v1717
    %v2227 = vpop.permute.xlu0 %2226
    %2229 = vset.pattern.permute.xlu0 4
    %2230 = vperm.xlu0 %2229, %v1718
    %v2231 = vpop.permute.xlu0 %2230
    %2233 = vset.pattern.permute.xlu0 4
    %2234 = vperm.xlu0 %2233, %v1719
    %v2235 = vpop.permute.xlu0 %2234
    %2237 = vset.pattern.permute.xlu0 4
    %2238 = vperm.xlu0 %2237, %v1720
    %v2239 = vpop.permute.xlu0 %2238
    %2241 = vset.pattern.permute.xlu0 4
    %2242 = vperm.xlu0 %2241, %v1721
    %v2243 = vpop.permute.xlu0 %2242
    %2245 = vset.pattern.permute.xlu0 4
    %2246 = vperm.xlu0 %2245, %v1722
    %v2247 = vpop.permute.xlu0 %2246
    %2249 = vset.pattern.permute.xlu0 4
    %2250 = vperm.xlu0 %2249, %v1723
    %v2251 = vpop.permute.xlu0 %2250
    %2253 = vset.pattern.permute.xlu0 4
    %2254 = vperm.xlu0 %2253, %v1724
    %v2255 = vpop.permute.xlu0 %2254
    %v2257 = vmul.f32 %v2192, %v2195
    %v2258 = vmul.f32 %v2192, %v2199
    %v2259 = vmul.f32 %v2192, %v2203
    %v2260 = vmul.f32 %v2192, %v2207
    %v2261 = vmul.f32 %v2192, %v2211
    %v2262 = vmul.f32 %v2192, %v2215
    %v2263 = vmul.f32 %v2192, %v2219
    %v2264 = vmul.f32 %v2192, %v2223
    %v2265 = vmul.f32 %v2192, %v2227
    %v2266 = vmul.f32 %v2192, %v2231
    %v2267 = vmul.f32 %v2192, %v2235
    %v2268 = vmul.f32 %v2192, %v2239
    %v2269 = vmul.f32 %v2192, %v2243
    %v2270 = vmul.f32 %v2192, %v2247
    %v2271 = vmul.f32 %v2192, %v2251
    %v2272 = vmul.f32 %v2192, %v2255
    %v2273 = vadd.f32 %v2257, 1.0
    %v2274 = vadd.f32 %v2258, 1.0
    %v2275 = vadd.f32 %v2259, 1.0
    %v2276 = vadd.f32 %v2260, 1.0
    %v2277 = vadd.f32 %v2261, 1.0
    %v2278 = vadd.f32 %v2262, 1.0
    %v2279 = vadd.f32 %v2263, 1.0
    %v2280 = vadd.f32 %v2264, 1.0
    %v2281 = vadd.f32 %v2265, 1.0
    %v2282 = vadd.f32 %v2266, 1.0
    %v2283 = vadd.f32 %v2267, 1.0
    %v2284 = vadd.f32 %v2268, 1.0
    %v2285 = vadd.f32 %v2269, 1.0
    %v2286 = vadd.f32 %v2270, 1.0
    %v2287 = vadd.f32 %v2271, 1.0
    %v2288 = vadd.f32 %v2272, 1.0
    %v2289 = vmul.f32 %v2173, %v2273
    %v2290 = vmul.f32 %v2174, %v2274
    %v2291 = vmul.f32 %v2175, %v2275
    %v2292 = vmul.f32 %v2176, %v2276
    %v2293 = vmul.f32 %v2177, %v2277
    %v2294 = vmul.f32 %v2178, %v2278
    %v2295 = vmul.f32 %v2179, %v2279
    %v2296 = vmul.f32 %v2180, %v2280
    %v2297 = vmul.f32 %v2181, %v2281
    %v2298 = vmul.f32 %v2182, %v2282
    %v2299 = vmul.f32 %v2183, %v2283
    %v2300 = vmul.f32 %v2184, %v2284
    %v2301 = vmul.f32 %v2185, %v2285
    %v2302 = vmul.f32 %v2186, %v2286
    %v2303 = vmul.f32 %v2187, %v2287
    %v2304 = vmul.f32 %v2188, %v2288
    %v2305 = vlaneseq
    %v2306 = vshrl.u32 %v2305, 7
    %v2307 = vsub.s32 5, %v2306
    %v2308 = vrot.slane %v1708, %v2307
    %2309 = vset.pattern.permute.xlu0 5
    %2310 = vperm.xlu0 %2309, %v1709
    %v2311 = vpop.permute.xlu0 %2310
    %2313 = vset.pattern.permute.xlu0 5
    %2314 = vperm.xlu0 %2313, %v1710
    %v2315 = vpop.permute.xlu0 %2314
    %2317 = vset.pattern.permute.xlu0 5
    %2318 = vperm.xlu0 %2317, %v1711
    %v2319 = vpop.permute.xlu0 %2318
    %2321 = vset.pattern.permute.xlu0 5
    %2322 = vperm.xlu0 %2321, %v1712
    %v2323 = vpop.permute.xlu0 %2322
    %2325 = vset.pattern.permute.xlu0 5
    %2326 = vperm.xlu0 %2325, %v1713
    %v2327 = vpop.permute.xlu0 %2326
    %2329 = vset.pattern.permute.xlu0 5
    %2330 = vperm.xlu0 %2329, %v1714
    %v2331 = vpop.permute.xlu0 %2330
    %2333 = vset.pattern.permute.xlu0 5
    %2334 = vperm.xlu0 %2333, %v1715
    %v2335 = vpop.permute.xlu0 %2334
    %2337 = vset.pattern.permute.xlu0 5
    %2338 = vperm.xlu0 %2337, %v1716
    %v2339 = vpop.permute.xlu0 %2338
    %2341 = vset.pattern.permute.xlu0 5
    %2342 = vperm.xlu0 %2341, %v1717
    %v2343 = vpop.permute.xlu0 %2342
    %2345 = vset.pattern.permute.xlu0 5
    %2346 = vperm.xlu0 %2345, %v1718
    %v2347 = vpop.permute.xlu0 %2346
    %2349 = vset.pattern.permute.xlu0 5
    %2350 = vperm.xlu0 %2349, %v1719
    %v2351 = vpop.permute.xlu0 %2350
    %2353 = vset.pattern.permute.xlu0 5
    %2354 = vperm.xlu0 %2353, %v1720
    %v2355 = vpop.permute.xlu0 %2354
    %2357 = vset.pattern.permute.xlu0 5
    %2358 = vperm.xlu0 %2357, %v1721
    %v2359 = vpop.permute.xlu0 %2358
    %2361 = vset.pattern.permute.xlu0 5
    %2362 = vperm.xlu0 %2361, %v1722
    %v2363 = vpop.permute.xlu0 %2362
    %2365 = vset.pattern.permute.xlu0 5
    %2366 = vperm.xlu0 %2365, %v1723
    %v2367 = vpop.permute.xlu0 %2366
    %2369 = vset.pattern.permute.xlu0 5
    %2370 = vperm.xlu0 %2369, %v1724
    %v2371 = vpop.permute.xlu0 %2370
    %v2373 = vmul.f32 %v2308, %v2311
    %v2374 = vmul.f32 %v2308, %v2315
    %v2375 = vmul.f32 %v2308, %v2319
    %v2376 = vmul.f32 %v2308, %v2323
    %v2377 = vmul.f32 %v2308, %v2327
    %v2378 = vmul.f32 %v2308, %v2331
    %v2379 = vmul.f32 %v2308, %v2335
    %v2380 = vmul.f32 %v2308, %v2339
    %v2381 = vmul.f32 %v2308, %v2343
    %v2382 = vmul.f32 %v2308, %v2347
    %v2383 = vmul.f32 %v2308, %v2351
    %v2384 = vmul.f32 %v2308, %v2355
    %v2385 = vmul.f32 %v2308, %v2359
    %v2386 = vmul.f32 %v2308, %v2363
    %v2387 = vmul.f32 %v2308, %v2367
    %v2388 = vmul.f32 %v2308, %v2371
    %v2389 = vadd.f32 %v2373, 1.0
    %v2390 = vadd.f32 %v2374, 1.0
    %v2391 = vadd.f32 %v2375, 1.0
    %v2392 = vadd.f32 %v2376, 1.0
    %v2393 = vadd.f32 %v2377, 1.0
    %v2394 = vadd.f32 %v2378, 1.0
    %v2395 = vadd.f32 %v2379, 1.0
    %v2396 = vadd.f32 %v2380, 1.0
    %v2397 = vadd.f32 %v2381, 1.0
    %v2398 = vadd.f32 %v2382, 1.0
    %v2399 = vadd.f32 %v2383, 1.0
    %v2400 = vadd.f32 %v2384, 1.0
    %v2401 = vadd.f32 %v2385, 1.0
    %v2402 = vadd.f32 %v2386, 1.0
    %v2403 = vadd.f32 %v2387, 1.0
    %v2404 = vadd.f32 %v2388, 1.0
    %v2405 = vmul.f32 %v2289, %v2389
    %v2406 = vmul.f32 %v2290, %v2390
    %v2407 = vmul.f32 %v2291, %v2391
    %v2408 = vmul.f32 %v2292, %v2392
    %v2409 = vmul.f32 %v2293, %v2393
    %v2410 = vmul.f32 %v2294, %v2394
    %v2411 = vmul.f32 %v2295, %v2395
    %v2412 = vmul.f32 %v2296, %v2396
    %v2413 = vmul.f32 %v2297, %v2397
    %v2414 = vmul.f32 %v2298, %v2398
    %v2415 = vmul.f32 %v2299, %v2399
    %v2416 = vmul.f32 %v2300, %v2400
    %v2417 = vmul.f32 %v2301, %v2401
    %v2418 = vmul.f32 %v2302, %v2402
    %v2419 = vmul.f32 %v2303, %v2403
    %v2420 = vmul.f32 %v2304, %v2404
    %v2421 = vlaneseq
    %v2422 = vshrl.u32 %v2421, 7
    %v2423 = vsub.s32 6, %v2422
    %v2424 = vrot.slane %v1708, %v2423
    %2425 = vset.pattern.permute.xlu0 6
    %2426 = vperm.xlu0 %2425, %v1709
    %v2427 = vpop.permute.xlu0 %2426
    %2429 = vset.pattern.permute.xlu0 6
    %2430 = vperm.xlu0 %2429, %v1710
    %v2431 = vpop.permute.xlu0 %2430
    %2433 = vset.pattern.permute.xlu0 6
    %2434 = vperm.xlu0 %2433, %v1711
    %v2435 = vpop.permute.xlu0 %2434
    %2437 = vset.pattern.permute.xlu0 6
    %2438 = vperm.xlu0 %2437, %v1712
    %v2439 = vpop.permute.xlu0 %2438
    %2441 = vset.pattern.permute.xlu0 6
    %2442 = vperm.xlu0 %2441, %v1713
    %v2443 = vpop.permute.xlu0 %2442
    %2445 = vset.pattern.permute.xlu0 6
    %2446 = vperm.xlu0 %2445, %v1714
    %v2447 = vpop.permute.xlu0 %2446
    %2449 = vset.pattern.permute.xlu0 6
    %2450 = vperm.xlu0 %2449, %v1715
    %v2451 = vpop.permute.xlu0 %2450
    %2453 = vset.pattern.permute.xlu0 6
    %2454 = vperm.xlu0 %2453, %v1716
    %v2455 = vpop.permute.xlu0 %2454
    %2457 = vset.pattern.permute.xlu0 6
    %2458 = vperm.xlu0 %2457, %v1717
    %v2459 = vpop.permute.xlu0 %2458
    %2461 = vset.pattern.permute.xlu0 6
    %2462 = vperm.xlu0 %2461, %v1718
    %v2463 = vpop.permute.xlu0 %2462
    %2465 = vset.pattern.permute.xlu0 6
    %2466 = vperm.xlu0 %2465, %v1719
    %v2467 = vpop.permute.xlu0 %2466
    %2469 = vset.pattern.permute.xlu0 6
    %2470 = vperm.xlu0 %2469, %v1720
    %v2471 = vpop.permute.xlu0 %2470
    %2473 = vset.pattern.permute.xlu0 6
    %2474 = vperm.xlu0 %2473, %v1721
    %v2475 = vpop.permute.xlu0 %2474
    %2477 = vset.pattern.permute.xlu0 6
    %2478 = vperm.xlu0 %2477, %v1722
    %v2479 = vpop.permute.xlu0 %2478
    %2481 = vset.pattern.permute.xlu0 6
    %2482 = vperm.xlu0 %2481, %v1723
    %v2483 = vpop.permute.xlu0 %2482
    %2485 = vset.pattern.permute.xlu0 6
    %2486 = vperm.xlu0 %2485, %v1724
    %v2487 = vpop.permute.xlu0 %2486
    %v2489 = vmul.f32 %v2424, %v2427
    %v2490 = vmul.f32 %v2424, %v2431
    %v2491 = vmul.f32 %v2424, %v2435
    %v2492 = vmul.f32 %v2424, %v2439
    %v2493 = vmul.f32 %v2424, %v2443
    %v2494 = vmul.f32 %v2424, %v2447
    %v2495 = vmul.f32 %v2424, %v2451
    %v2496 = vmul.f32 %v2424, %v2455
    %v2497 = vmul.f32 %v2424, %v2459
    %v2498 = vmul.f32 %v2424, %v2463
    %v2499 = vmul.f32 %v2424, %v2467
    %v2500 = vmul.f32 %v2424, %v2471
    %v2501 = vmul.f32 %v2424, %v2475
    %v2502 = vmul.f32 %v2424, %v2479
    %v2503 = vmul.f32 %v2424, %v2483
    %v2504 = vmul.f32 %v2424, %v2487
    %v2505 = vadd.f32 %v2489, 1.0
    %v2506 = vadd.f32 %v2490, 1.0
    %v2507 = vadd.f32 %v2491, 1.0
    %v2508 = vadd.f32 %v2492, 1.0
    %v2509 = vadd.f32 %v2493, 1.0
    %v2510 = vadd.f32 %v2494, 1.0
    %v2511 = vadd.f32 %v2495, 1.0
    %v2512 = vadd.f32 %v2496, 1.0
    %v2513 = vadd.f32 %v2497, 1.0
    %v2514 = vadd.f32 %v2498, 1.0
    %v2515 = vadd.f32 %v2499, 1.0
    %v2516 = vadd.f32 %v2500, 1.0
    %v2517 = vadd.f32 %v2501, 1.0
    %v2518 = vadd.f32 %v2502, 1.0
    %v2519 = vadd.f32 %v2503, 1.0
    %v2520 = vadd.f32 %v2504, 1.0
    %v2521 = vmul.f32 %v2405, %v2505
    %v2522 = vmul.f32 %v2406, %v2506
    %v2523 = vmul.f32 %v2407, %v2507
    %v2524 = vmul.f32 %v2408, %v2508
    %v2525 = vmul.f32 %v2409, %v2509
    %v2526 = vmul.f32 %v2410, %v2510
    %v2527 = vmul.f32 %v2411, %v2511
    %v2528 = vmul.f32 %v2412, %v2512
    %v2529 = vmul.f32 %v2413, %v2513
    %v2530 = vmul.f32 %v2414, %v2514
    %v2531 = vmul.f32 %v2415, %v2515
    %v2532 = vmul.f32 %v2416, %v2516
    %v2533 = vmul.f32 %v2417, %v2517
    %v2534 = vmul.f32 %v2418, %v2518
    %v2535 = vmul.f32 %v2419, %v2519
    %v2536 = vmul.f32 %v2420, %v2520
    %v2537 = vlaneseq
    %v2538 = vshrl.u32 %v2537, 7
    %v2539 = vsub.s32 7, %v2538
    %v2540 = vrot.slane %v1708, %v2539
    %2541 = vset.pattern.permute.xlu0 7
    %2542 = vperm.xlu0 %2541, %v1709
    %v2543 = vpop.permute.xlu0 %2542
    %2545 = vset.pattern.permute.xlu0 7
    %2546 = vperm.xlu0 %2545, %v1710
    %v2547 = vpop.permute.xlu0 %2546
    %2549 = vset.pattern.permute.xlu0 7
    %2550 = vperm.xlu0 %2549, %v1711
    %v2551 = vpop.permute.xlu0 %2550
    %2553 = vset.pattern.permute.xlu0 7
    %2554 = vperm.xlu0 %2553, %v1712
    %v2555 = vpop.permute.xlu0 %2554
    %2557 = vset.pattern.permute.xlu0 7
    %2558 = vperm.xlu0 %2557, %v1713
    %v2559 = vpop.permute.xlu0 %2558
    %2561 = vset.pattern.permute.xlu0 7
    %2562 = vperm.xlu0 %2561, %v1714
    %v2563 = vpop.permute.xlu0 %2562
    %2565 = vset.pattern.permute.xlu0 7
    %2566 = vperm.xlu0 %2565, %v1715
    %v2567 = vpop.permute.xlu0 %2566
    %2569 = vset.pattern.permute.xlu0 7
    %2570 = vperm.xlu0 %2569, %v1716
    %v2571 = vpop.permute.xlu0 %2570
    %2573 = vset.pattern.permute.xlu0 7
    %2574 = vperm.xlu0 %2573, %v1717
    %v2575 = vpop.permute.xlu0 %2574
    %2577 = vset.pattern.permute.xlu0 7
    %2578 = vperm.xlu0 %2577, %v1718
    %v2579 = vpop.permute.xlu0 %2578
    %2581 = vset.pattern.permute.xlu0 7
    %2582 = vperm.xlu0 %2581, %v1719
    %v2583 = vpop.permute.xlu0 %2582
    %2585 = vset.pattern.permute.xlu0 7
    %2586 = vperm.xlu0 %2585, %v1720
    %v2587 = vpop.permute.xlu0 %2586
    %2589 = vset.pattern.permute.xlu0 7
    %2590 = vperm.xlu0 %2589, %v1721
    %v2591 = vpop.permute.xlu0 %2590
    %2593 = vset.pattern.permute.xlu0 7
    %2594 = vperm.xlu0 %2593, %v1722
    %v2595 = vpop.permute.xlu0 %2594
    %2597 = vset.pattern.permute.xlu0 7
    %2598 = vperm.xlu0 %2597, %v1723
    %v2599 = vpop.permute.xlu0 %2598
    %2601 = vset.pattern.permute.xlu0 7
    %2602 = vperm.xlu0 %2601, %v1724
    %v2603 = vpop.permute.xlu0 %2602
    %v2605 = vmul.f32 %v2540, %v2543
    %v2606 = vmul.f32 %v2540, %v2547
    %v2607 = vmul.f32 %v2540, %v2551
    %v2608 = vmul.f32 %v2540, %v2555
    %v2609 = vmul.f32 %v2540, %v2559
    %v2610 = vmul.f32 %v2540, %v2563
    %v2611 = vmul.f32 %v2540, %v2567
    %v2612 = vmul.f32 %v2540, %v2571
    %v2613 = vmul.f32 %v2540, %v2575
    %v2614 = vmul.f32 %v2540, %v2579
    %v2615 = vmul.f32 %v2540, %v2583
    %v2616 = vmul.f32 %v2540, %v2587
    %v2617 = vmul.f32 %v2540, %v2591
    %v2618 = vmul.f32 %v2540, %v2595
    %v2619 = vmul.f32 %v2540, %v2599
    %v2620 = vmul.f32 %v2540, %v2603
    %v2621 = vadd.f32 %v2605, 1.0
    %v2622 = vadd.f32 %v2606, 1.0
    %v2623 = vadd.f32 %v2607, 1.0
    %v2624 = vadd.f32 %v2608, 1.0
    %v2625 = vadd.f32 %v2609, 1.0
    %v2626 = vadd.f32 %v2610, 1.0
    %v2627 = vadd.f32 %v2611, 1.0
    %v2628 = vadd.f32 %v2612, 1.0
    %v2629 = vadd.f32 %v2613, 1.0
    %v2630 = vadd.f32 %v2614, 1.0
    %v2631 = vadd.f32 %v2615, 1.0
    %v2632 = vadd.f32 %v2616, 1.0
    %v2633 = vadd.f32 %v2617, 1.0
    %v2634 = vadd.f32 %v2618, 1.0
    %v2635 = vadd.f32 %v2619, 1.0
    %v2636 = vadd.f32 %v2620, 1.0
    %v2637 = vmul.f32 %v2521, %v2621
    %v2638 = vmul.f32 %v2522, %v2622
    %v2639 = vmul.f32 %v2523, %v2623
    %v2640 = vmul.f32 %v2524, %v2624
    %v2641 = vmul.f32 %v2525, %v2625
    %v2642 = vmul.f32 %v2526, %v2626
    %v2643 = vmul.f32 %v2527, %v2627
    %v2644 = vmul.f32 %v2528, %v2628
    %v2645 = vmul.f32 %v2529, %v2629
    %v2646 = vmul.f32 %v2530, %v2630
    %v2647 = vmul.f32 %v2531, %v2631
    %v2648 = vmul.f32 %v2532, %v2632
    %v2649 = vmul.f32 %v2533, %v2633
    %v2650 = vmul.f32 %v2534, %v2634
    %v2651 = vmul.f32 %v2535, %v2635
    %v2652 = vmul.f32 %v2536, %v2636
    %v2653 = vld [vmem:[%s3] sm:$0xff]
    %v2654 = vld [vmem:[%s3 + $0x8] sm:$0xff]
    %vm2655 = vcmask 130048
    %v2657 = vsel %vm2655, %v21, 0
    %v2660 = vsel %vm2655, %v22, 0
    %v2663 = vsel %vm2655, %v23, 0
    %v2666 = vsel %vm2655, %v24, 0
    %v2669 = vsel %vm2655, %v25, 0
    %v2672 = vsel %vm2655, %v26, 0
    %v2675 = vsel %vm2655, %v27, 0
    %v2678 = vsel %vm2655, %v28, 0
    %v2681 = vsel %vm2655, %v29, 0
    %v2684 = vsel %vm2655, %v30, 0
    %v2687 = vsel %vm2655, %v31, 0
    %v2690 = vsel %vm2655, %v32, 0
    %v2693 = vsel %vm2655, %v33, 0
    %v2696 = vsel %vm2655, %v34, 0
    %v2699 = vsel %vm2655, %v35, 0
    %v2702 = vsel %vm2655, %v36, 0
    %2704 = vmatprep.subr.mxu0 0.0
    %2705 = vmatpush1.msra.mxu0 0.0
    %2706 = vmatprep.subr.mxu0 0.0
    %2707 = vmatpush1.msra.mxu0 0.0
    %2708 = vmatprep.subr.mxu0 0.0
    %2709 = vmatpush1.msra.mxu0 0.0
    %2710 = vmatprep.subr.mxu0 0.0
    %2711 = vmatpush1.msra.mxu0 0.0
    %2712 = vmatprep.subr.mxu0 0.0
    %2713 = vmatpush1.msra.mxu0 0.0
    %2714 = vmatprep.subr.mxu0 0.0
    %2715 = vmatpush1.msra.mxu0 0.0
    %2716 = vmatprep.subr.mxu0 0.0
    %2717 = vmatpush1.msra.mxu0 0.0
    %2718 = vmatprep.subr.mxu0 0.0
    %2719 = vmatpush1.msra.mxu0 0.0
    %2720 = vmatprep.subr.mxu0 0.0
    %2721 = vmatpush1.msra.mxu0 0.0
    %2722 = vmatprep.subr.mxu0 0.0
    %2723 = vmatpush1.msra.mxu0 0.0
    %2724 = vmatprep.subr.mxu0 0.0
    %2725 = vmatpush1.msra.mxu0 0.0
    %2726 = vmatprep.subr.mxu0 0.0
    %2727 = vmatpush1.msra.mxu0 0.0
    %2728 = vmatprep.subr.mxu0 0.0
    %2729 = vmatpush1.msra.mxu0 0.0
    %2730 = vmatprep.subr.mxu0 0.0
    %2731 = vmatpush1.msra.mxu0 0.0
    %2732 = vmatprep.subr.mxu0 0.0
    %2733 = vmatpush1.msra.mxu0 %v2654
    %2734 = vmatprep.subr.mxu0 0.0
    %2735 = vmatpush1.msra.mxu0 %v2653
    %2736 = vmatprep.subr.mxu0 0.0
    %2737 = vmatpush2.msra.mxu0 0.0
    %2738 = vmatprep.subr.mxu0 0.0
    %2739 = vmatpush2.msra.mxu0 0.0
    %2740 = vmatprep.subr.mxu0 0.0
    %2741 = vmatpush2.msra.mxu0 0.0
    %2742 = vmatprep.subr.mxu0 0.0
    %2743 = vmatpush2.msra.mxu0 0.0
    %2744 = vmatprep.subr.mxu0 0.0
    %2745 = vmatpush2.msra.mxu0 0.0
    %2746 = vmatprep.subr.mxu0 0.0
    %2747 = vmatpush2.msra.mxu0 0.0
    %2748 = vmatprep.subr.mxu0 0.0
    %2749 = vmatpush2.msra.mxu0 0.0
    %2750 = vmatprep.subr.mxu0 0.0
    %2751 = vmatpush2.msra.mxu0 0.0
    %2752 = vmatprep.subr.mxu0 0.0
    %2753 = vmatpush2.msra.mxu0 0.0
    %2754 = vmatprep.subr.mxu0 0.0
    %2755 = vmatpush2.msra.mxu0 0.0
    %2756 = vmatprep.subr.mxu0 0.0
    %2757 = vmatpush2.msra.mxu0 0.0
    %2758 = vmatprep.subr.mxu0 0.0
    %2759 = vmatpush2.msra.mxu0 0.0
    %2760 = vmatprep.subr.mxu0 0.0
    %2761 = vmatpush2.msra.mxu0 0.0
    %2762 = vmatprep.subr.mxu0 0.0
    %2763 = vmatpush2.msra.mxu0 0.0
    %2764 = vmatprep.subr.mxu0 0.0
    %2765 = vmatpush2.msra.mxu0 0.0
    %2766 = vmatprep.subr.mxu0 0.0
    %2767 = vmatpush2.msra.mxu0 0.0
    %2768 = vmatprep.mubr.f32.mxu0 0.0
    %2769 = vmatmul.mubr.f32.gmra.mxu0 %v2657
    %v2770 = vpop.f32.mrf.mxu0
    %v2771 = vadd.f32 0.0, %v2770
    %v2772 = vpop.f32.mrf.mxu0
    %2773 = vmatprep.mubr.f32.mxu0 0.0
    %2774 = vmatmul.mubr.f32.gmra.mxu0 %v2660
    %v2775 = vpop.f32.mrf.mxu0
    %v2776 = vadd.f32 0.0, %v2775
    %v2777 = vpop.f32.mrf.mxu0
    %2778 = vmatprep.mubr.f32.mxu0 0.0
    %2779 = vmatmul.mubr.f32.gmra.mxu0 %v2663
    %v2780 = vpop.f32.mrf.mxu0
    %v2781 = vadd.f32 0.0, %v2780
    %v2782 = vpop.f32.mrf.mxu0
    %2783 = vmatprep.mubr.f32.mxu0 0.0
    %2784 = vmatmul.mubr.f32.gmra.mxu0 %v2666
    %v2785 = vpop.f32.mrf.mxu0
    %v2786 = vadd.f32 0.0, %v2785
    %v2787 = vpop.f32.mrf.mxu0
    %2788 = vmatprep.mubr.f32.mxu0 0.0
    %2789 = vmatmul.mubr.f32.gmra.mxu0 %v2669
    %v2790 = vpop.f32.mrf.mxu0
    %v2791 = vadd.f32 0.0, %v2790
    %v2792 = vpop.f32.mrf.mxu0
    %2793 = vmatprep.mubr.f32.mxu0 0.0
    %2794 = vmatmul.mubr.f32.gmra.mxu0 %v2672
    %v2795 = vpop.f32.mrf.mxu0
    %v2796 = vadd.f32 0.0, %v2795
    %v2797 = vpop.f32.mrf.mxu0
    %2798 = vmatprep.mubr.f32.mxu0 0.0
    %2799 = vmatmul.mubr.f32.gmra.mxu0 %v2675
    %v2800 = vpop.f32.mrf.mxu0
    %v2801 = vadd.f32 0.0, %v2800
    %v2802 = vpop.f32.mrf.mxu0
    %2803 = vmatprep.mubr.f32.mxu0 0.0
    %2804 = vmatmul.mubr.f32.gmra.mxu0 %v2678
    %v2805 = vpop.f32.mrf.mxu0
    %v2806 = vadd.f32 0.0, %v2805
    %v2807 = vpop.f32.mrf.mxu0
    %2808 = vmatprep.mubr.f32.mxu0 0.0
    %2809 = vmatmul.mubr.f32.gmra.mxu0 %v2681
    %v2810 = vpop.f32.mrf.mxu0
    %v2811 = vadd.f32 0.0, %v2810
    %v2812 = vpop.f32.mrf.mxu0
    %2813 = vmatprep.mubr.f32.mxu0 0.0
    %2814 = vmatmul.mubr.f32.gmra.mxu0 %v2684
    %v2815 = vpop.f32.mrf.mxu0
    %v2816 = vadd.f32 0.0, %v2815
    %v2817 = vpop.f32.mrf.mxu0
    %2818 = vmatprep.mubr.f32.mxu0 0.0
    %2819 = vmatmul.mubr.f32.gmra.mxu0 %v2687
    %v2820 = vpop.f32.mrf.mxu0
    %v2821 = vadd.f32 0.0, %v2820
    %v2822 = vpop.f32.mrf.mxu0
    %2823 = vmatprep.mubr.f32.mxu0 0.0
    %2824 = vmatmul.mubr.f32.gmra.mxu0 %v2690
    %v2825 = vpop.f32.mrf.mxu0
    %v2826 = vadd.f32 0.0, %v2825
    %v2827 = vpop.f32.mrf.mxu0
    %2828 = vmatprep.mubr.f32.mxu0 0.0
    %2829 = vmatmul.mubr.f32.gmra.mxu0 %v2693
    %v2830 = vpop.f32.mrf.mxu0
    %v2831 = vadd.f32 0.0, %v2830
    %v2832 = vpop.f32.mrf.mxu0
    %2833 = vmatprep.mubr.f32.mxu0 0.0
    %2834 = vmatmul.mubr.f32.gmra.mxu0 %v2696
    %v2835 = vpop.f32.mrf.mxu0
    %v2836 = vadd.f32 0.0, %v2835
    %v2837 = vpop.f32.mrf.mxu0
    %2838 = vmatprep.mubr.f32.mxu0 0.0
    %2839 = vmatmul.mubr.f32.gmra.mxu0 %v2699
    %v2840 = vpop.f32.mrf.mxu0
    %v2841 = vadd.f32 0.0, %v2840
    %v2842 = vpop.f32.mrf.mxu0
    %2843 = vmatprep.mubr.f32.mxu0 0.0
    %2844 = vmatmul.mubr.f32.gmra.mxu0 %v2702
    %v2845 = vpop.f32.mrf.mxu0
    %v2846 = vadd.f32 0.0, %v2845
    %v2847 = vpop.f32.mrf.mxu0
    %2848 = vdwg.mxu0
    %v2849 = vld [vmem:[%s4] sm:$0xff]
    %v2850 = vld [vmem:[%s4 + $0x8] sm:$0xff]
    %2851 = vmatprep.subr.mxu0 0.0
    %2852 = vmatpush1.msra.mxu0 0.0
    %2853 = vmatprep.subr.mxu0 0.0
    %2854 = vmatpush1.msra.mxu0 0.0
    %2855 = vmatprep.subr.mxu0 0.0
    %2856 = vmatpush1.msra.mxu0 0.0
    %2857 = vmatprep.subr.mxu0 0.0
    %2858 = vmatpush1.msra.mxu0 0.0
    %2859 = vmatprep.subr.mxu0 0.0
    %2860 = vmatpush1.msra.mxu0 0.0
    %2861 = vmatprep.subr.mxu0 0.0
    %2862 = vmatpush1.msra.mxu0 0.0
    %2863 = vmatprep.subr.mxu0 0.0
    %2864 = vmatpush1.msra.mxu0 0.0
    %2865 = vmatprep.subr.mxu0 0.0
    %2866 = vmatpush1.msra.mxu0 0.0
    %2867 = vmatprep.subr.mxu0 0.0
    %2868 = vmatpush1.msra.mxu0 0.0
    %2869 = vmatprep.subr.mxu0 0.0
    %2870 = vmatpush1.msra.mxu0 0.0
    %2871 = vmatprep.subr.mxu0 0.0
    %2872 = vmatpush1.msra.mxu0 0.0
    %2873 = vmatprep.subr.mxu0 0.0
    %2874 = vmatpush1.msra.mxu0 0.0
    %2875 = vmatprep.subr.mxu0 0.0
    %2876 = vmatpush1.msra.mxu0 0.0
    %2877 = vmatprep.subr.mxu0 0.0
    %2878 = vmatpush1.msra.mxu0 0.0
    %2879 = vmatprep.subr.mxu0 0.0
    %2880 = vmatpush1.msra.mxu0 %v2850
    %2881 = vmatprep.subr.mxu0 0.0
    %2882 = vmatpush1.msra.mxu0 %v2849
    %2883 = vmatprep.subr.mxu0 0.0
    %2884 = vmatpush2.msra.mxu0 0.0
    %2885 = vmatprep.subr.mxu0 0.0
    %2886 = vmatpush2.msra.mxu0 0.0
    %2887 = vmatprep.subr.mxu0 0.0
    %2888 = vmatpush2.msra.mxu0 0.0
    %2889 = vmatprep.subr.mxu0 0.0
    %2890 = vmatpush2.msra.mxu0 0.0
    %2891 = vmatprep.subr.mxu0 0.0
    %2892 = vmatpush2.msra.mxu0 0.0
    %2893 = vmatprep.subr.mxu0 0.0
    %2894 = vmatpush2.msra.mxu0 0.0
    %2895 = vmatprep.subr.mxu0 0.0
    %2896 = vmatpush2.msra.mxu0 0.0
    %2897 = vmatprep.subr.mxu0 0.0
    %2898 = vmatpush2.msra.mxu0 0.0
    %2899 = vmatprep.subr.mxu0 0.0
    %2900 = vmatpush2.msra.mxu0 0.0
    %2901 = vmatprep.subr.mxu0 0.0
    %2902 = vmatpush2.msra.mxu0 0.0
    %2903 = vmatprep.subr.mxu0 0.0
    %2904 = vmatpush2.msra.mxu0 0.0
    %2905 = vmatprep.subr.mxu0 0.0
    %2906 = vmatpush2.msra.mxu0 0.0
    %2907 = vmatprep.subr.mxu0 0.0
    %2908 = vmatpush2.msra.mxu0 0.0
    %2909 = vmatprep.subr.mxu0 0.0
    %2910 = vmatpush2.msra.mxu0 0.0
    %2911 = vmatprep.subr.mxu0 0.0
    %2912 = vmatpush2.msra.mxu0 0.0
    %2913 = vmatprep.subr.mxu0 0.0
    %2914 = vmatpush2.msra.mxu0 0.0
    %2915 = vmatprep.mubr.f32.mxu0 0.0
    %2916 = vmatmul.mubr.f32.gmra.mxu0 %v2657
    %v2917 = vpop.f32.mrf.mxu0
    %v2918 = vadd.f32 0.0, %v2917
    %v2919 = vpop.f32.mrf.mxu0
    %2920 = vmatprep.mubr.f32.mxu0 0.0
    %2921 = vmatmul.mubr.f32.gmra.mxu0 %v2660
    %v2922 = vpop.f32.mrf.mxu0
    %v2923 = vadd.f32 0.0, %v2922
    %v2924 = vpop.f32.mrf.mxu0
    %2925 = vmatprep.mubr.f32.mxu0 0.0
    %2926 = vmatmul.mubr.f32.gmra.mxu0 %v2663
    %v2927 = vpop.f32.mrf.mxu0
    %v2928 = vadd.f32 0.0, %v2927
    %v2929 = vpop.f32.mrf.mxu0
    %2930 = vmatprep.mubr.f32.mxu0 0.0
    %2931 = vmatmul.mubr.f32.gmra.mxu0 %v2666
    %v2932 = vpop.f32.mrf.mxu0
    %v2933 = vadd.f32 0.0, %v2932
    %v2934 = vpop.f32.mrf.mxu0
    %2935 = vmatprep.mubr.f32.mxu0 0.0
    %2936 = vmatmul.mubr.f32.gmra.mxu0 %v2669
    %v2937 = vpop.f32.mrf.mxu0
    %v2938 = vadd.f32 0.0, %v2937
    %v2939 = vpop.f32.mrf.mxu0
    %2940 = vmatprep.mubr.f32.mxu0 0.0
    %2941 = vmatmul.mubr.f32.gmra.mxu0 %v2672
    %v2942 = vpop.f32.mrf.mxu0
    %v2943 = vadd.f32 0.0, %v2942
    %v2944 = vpop.f32.mrf.mxu0
    %2945 = vmatprep.mubr.f32.mxu0 0.0
    %2946 = vmatmul.mubr.f32.gmra.mxu0 %v2675
    %v2947 = vpop.f32.mrf.mxu0
    %v2948 = vadd.f32 0.0, %v2947
    %v2949 = vpop.f32.mrf.mxu0
    %2950 = vmatprep.mubr.f32.mxu0 0.0
    %2951 = vmatmul.mubr.f32.gmra.mxu0 %v2678
    %v2952 = vpop.f32.mrf.mxu0
    %v2953 = vadd.f32 0.0, %v2952
    %v2954 = vpop.f32.mrf.mxu0
    %2955 = vmatprep.mubr.f32.mxu0 0.0
    %2956 = vmatmul.mubr.f32.gmra.mxu0 %v2681
    %v2957 = vpop.f32.mrf.mxu0
    %v2958 = vadd.f32 0.0, %v2957
    %v2959 = vpop.f32.mrf.mxu0
    %2960 = vmatprep.mubr.f32.mxu0 0.0
    %2961 = vmatmul.mubr.f32.gmra.mxu0 %v2684
    %v2962 = vpop.f32.mrf.mxu0
    %v2963 = vadd.f32 0.0, %v2962
    %v2964 = vpop.f32.mrf.mxu0
    %2965 = vmatprep.mubr.f32.mxu0 0.0
    %2966 = vmatmul.mubr.f32.gmra.mxu0 %v2687
    %v2967 = vpop.f32.mrf.mxu0
    %v2968 = vadd.f32 0.0, %v2967
    %v2969 = vpop.f32.mrf.mxu0
    %2970 = vmatprep.mubr.f32.mxu0 0.0
    %2971 = vmatmul.mubr.f32.gmra.mxu0 %v2690
    %v2972 = vpop.f32.mrf.mxu0
    %v2973 = vadd.f32 0.0, %v2972
    %v2974 = vpop.f32.mrf.mxu0
    %2975 = vmatprep.mubr.f32.mxu0 0.0
    %2976 = vmatmul.mubr.f32.gmra.mxu0 %v2693
    %v2977 = vpop.f32.mrf.mxu0
    %v2978 = vadd.f32 0.0, %v2977
    %v2979 = vpop.f32.mrf.mxu0
    %2980 = vmatprep.mubr.f32.mxu0 0.0
    %2981 = vmatmul.mubr.f32.gmra.mxu0 %v2696
    %v2982 = vpop.f32.mrf.mxu0
    %v2983 = vadd.f32 0.0, %v2982
    %v2984 = vpop.f32.mrf.mxu0
    %2985 = vmatprep.mubr.f32.mxu0 0.0
    %2986 = vmatmul.mubr.f32.gmra.mxu0 %v2699
    %v2987 = vpop.f32.mrf.mxu0
    %v2988 = vadd.f32 0.0, %v2987
    %v2989 = vpop.f32.mrf.mxu0
    %2990 = vmatprep.mubr.f32.mxu0 0.0
    %2991 = vmatmul.mubr.f32.gmra.mxu0 %v2702
    %v2992 = vpop.f32.mrf.mxu0
    %v2993 = vadd.f32 0.0, %v2992
    %v2994 = vpop.f32.mrf.mxu0
    %2995 = vdwg.mxu0
    %v2996 = vmul.f32 %v2771, %v2918
    %v2997 = vmul.f32 %v2776, %v2923
    %v2998 = vmul.f32 %v2781, %v2928
    %v2999 = vmul.f32 %v2786, %v2933
    %v3000 = vmul.f32 %v2791, %v2938
    %v3001 = vmul.f32 %v2796, %v2943
    %v3002 = vmul.f32 %v2801, %v2948
    %v3003 = vmul.f32 %v2806, %v2953
    %v3004 = vmul.f32 %v2811, %v2958
    %v3005 = vmul.f32 %v2816, %v2963
    %v3006 = vmul.f32 %v2821, %v2968
    %v3007 = vmul.f32 %v2826, %v2973
    %v3008 = vmul.f32 %v2831, %v2978
    %v3009 = vmul.f32 %v2836, %v2983
    %v3010 = vmul.f32 %v2841, %v2988
    %v3011 = vmul.f32 %v2846, %v2993
    %v3012 = vmul.f32 %v2996, %v2637
    %v3013 = vmul.f32 %v2997, %v2638
    %v3014 = vmul.f32 %v2998, %v2639
    %v3015 = vmul.f32 %v2999, %v2640
    %v3016 = vmul.f32 %v3000, %v2641
    %v3017 = vmul.f32 %v3001, %v2642
    %v3018 = vmul.f32 %v3002, %v2643
    %v3019 = vmul.f32 %v3003, %v2644
    %v3020 = vmul.f32 %v3004, %v2645
    %v3021 = vmul.f32 %v3005, %v2646
    %v3022 = vmul.f32 %v3006, %v2647
    %v3023 = vmul.f32 %v3007, %v2648
    %v3024 = vmul.f32 %v3008, %v2649
    %v3025 = vmul.f32 %v3009, %v2650
    %v3026 = vmul.f32 %v3010, %v2651
    %v3027 = vmul.f32 %v3011, %v2652
    %v3028 = vadd.f32 %v3012, %v3013
    %v3029 = vadd.f32 %v3028, %v3014
    %v3030 = vadd.f32 %v3029, %v3015
    %v3031 = vadd.f32 %v3030, %v3016
    %v3032 = vadd.f32 %v3031, %v3017
    %v3033 = vadd.f32 %v3032, %v3018
    %v3034 = vadd.f32 %v3033, %v3019
    %v3035 = vadd.f32 %v3034, %v3020
    %v3036 = vadd.f32 %v3035, %v3021
    %v3037 = vadd.f32 %v3036, %v3022
    %v3038 = vadd.f32 %v3037, %v3023
    %v3039 = vadd.f32 %v3038, %v3024
    %v3040 = vadd.f32 %v3039, %v3025
    %v3041 = vadd.f32 %v3040, %v3026
    %v3042 = vadd.f32 %v3041, %v3027
    %v3043 = vrot.slane %v3042, 4
    %v3044 = vadd.f32 %v3042, %v3043
    %v3045 = vrot.slane %v3044, 2
    %v3046 = vadd.f32 %v3044, %v3045
    %v3047 = vrot.slane %v3046, 1
    %v3048 = vadd.f32 %v3046, %v3047
    %3049 = vst [vmem:[#allocation2] sm:$0x1] %v3048
    // Predicated region
    $region22: #{tpu_custom_call.1} parent=1 // pred_check
      _
    $region23: #{tpu_custom_call.1} parent=1 // pred_check_branch
      %3051 = sbr.rel (0) target = $region25
    $region24: #{tpu_custom_call.1} parent=1 // pred_region
      %s3053 = ssub.s32 16, 16
      %3054 = vsyncadd [#allocation3], %s3053
      %s3056 = sshll.u32 [#allocation2], 4
      %s3057 = int_to_ptr.vmem [resolvable:$true] %s3056
      %3059 = dma.vmem_to_hbm [thread:$0]  %s3057, 16, %s5, [#allocation3]
    $region25: #{tpu_custom_call.1} parent=1 // pred_fallthru
      _
    // Predicated region
    $region26: #{tpu_custom_call.1} parent=1 // pred_check
      _
    $region27: #{tpu_custom_call.1} parent=1 // pred_check_branch
      %3061 = sbr.rel (0) target = $region29
    $region28: #{tpu_custom_call.1} parent=1 // pred_region
      %3062 = dma.done [#allocation3], 16
    $region29: #{tpu_custom_call.1} parent=1 // pred_fallthru
      _
    %3063 = vsyncpa [#allocation3], 1

</llo_original>
